<compile_context>
chip_gen: v5e
topology: v5e:2x2
jax: 0.10.0
libtpu: 0.0.40
codegen_flags: <defaults>
</compile_context>

<pallas_src>
import math
import functools

import numpy as np
import jax
import jax.numpy as jnp
from jax import lax
from jax.experimental import pallas as pl
from jax.experimental.pallas import tpu as pltpu

BN_EPS = 1e-5


# ------------------------------------------------------------------ #
#  Reference helper from the PyTorch source (pure python list logic)  #
# ------------------------------------------------------------------ #
def sparsenet_exponential_fetch(lst):
    return [lst[len(lst) - 2 ** i] for i in range(1 + math.floor(math.log(len(lst), 2)))]


# ------------------------------------------------------------------ #
#  Constant helper matrices (built once at trace time, live in VMEM)  #
# ------------------------------------------------------------------ #
@functools.lru_cache(maxsize=None)
def _shift_matrices_np(H, W):
    # S[t, q, p] = 1  iff spatial pixel q is the (dy-1, dx-1)-neighbor of p
    # (t = 3*dy + dx), zero otherwise.  Encodes SAME/zero padding exactly.
    HW = H * W
    S = np.zeros((9, HW, HW), np.float32)
    for dy in range(3):
        for dx in range(3):
            t = 3 * dy + dx
            for h in range(H):
                for w in range(W):
                    hh, ww = h + dy - 1, w + dx - 1
                    if 0 <= hh < H and 0 <= ww < W:
                        S[t, hh * W + ww, h * W + w] = 1.0
    return S


@functools.lru_cache(maxsize=None)
def _pool_matrix_np(H, W):
    # P[p, q] = 0.25 iff pixel p falls into 2x2 pooling window q.
    Ho, Wo = H // 2, W // 2
    P = np.zeros((H * W, Ho * Wo), np.float32)
    for h in range(H):
        for w in range(W):
            P[h * W + w, (h // 2) * Wo + (w // 2)] = 0.25
    return P


# --------------------------------- #
#  Pallas kernels (fused blocks)    #
# --------------------------------- #
def _sparse_block_kernel(x_ref, s1_ref, b1_ref, w1_ref, s2_ref, b2_ref,
                         w2_ref, shift_ref, o_ref):
    # x_ref:     (1, Cin, HW)    channel-major activation (NCHW flattened)
    # s*/b*:     (C, 1)          folded inference-BN scale / shift
    # w1_ref:    (Cmid, Cin)     1x1 conv weight (transposed)
    # w2_ref:    (Cout, 9*Cmid)  3x3 conv weight, tap-major flattened
    # shift_ref: (9, HW, HW)     0/1 shift matrices (zero padding included)
    # o_ref:     (1, Cout, HW)
    x = x_ref[0]                                                    # (Cin, HW)
    a0 = jnp.maximum(x * s1_ref[...] + b1_ref[...], 0.0)            # BN1+ReLU
    a1 = jnp.dot(w1_ref[...], a0,
                 preferred_element_type=jnp.float32)                # (Cmid, HW)
    a2 = jnp.maximum(a1 * s2_ref[...] + b2_ref[...], 0.0)           # BN2+ReLU
    # Build the im2col matrix (9*Cmid, HW) fully in VMEM, then one MXU matmul.
    taps = [jnp.dot(a2, shift_ref[t], preferred_element_type=jnp.float32)
            for t in range(9)]
    im2col = jnp.concatenate(taps, axis=0)                          # (9*Cmid, HW)
    o_ref[0] = jnp.dot(w2_ref[...], im2col,
                       preferred_element_type=jnp.float32)          # (Cout, HW)


def _transition_kernel(x_ref, s_ref, b_ref, w_ref, pool_ref, o_ref):
    # BN -> ReLU -> 1x1 conv -> AvgPool2d(2,2) (pool as matmul epilogue).
    a = jnp.maximum(x_ref[0] * s_ref[...] + b_ref[...], 0.0)        # (Cin, HW)
    h = jnp.dot(w_ref[...], a, preferred_element_type=jnp.float32)  # (Cout, HW)
    o_ref[0] = jnp.dot(h, pool_ref[...],
                       preferred_element_type=jnp.float32)          # (Cout, HW/4)


# --------------------------------- #
#  pallas_call wrappers             #
# --------------------------------- #
def _pallas_sparse_block(x, s1, b1, w1T, s2, b2, w2T, shift):
    N, Cin, HW = x.shape
    Cmid = w1T.shape[0]
    Cout = w2T.shape[0]
    return pl.pallas_call(
        _sparse_block_kernel,
        out_shape=jax.ShapeDtypeStruct((N, Cout, HW), jnp.float32),
        grid=(N,),
        in_specs=[
            pl.BlockSpec((1, Cin, HW), lambda n: (n, 0, 0)),
            pl.BlockSpec((Cin, 1), lambda n: (0, 0)),
            pl.BlockSpec((Cin, 1), lambda n: (0, 0)),
            pl.BlockSpec((Cmid, Cin), lambda n: (0, 0)),
            pl.BlockSpec((Cmid, 1), lambda n: (0, 0)),
            pl.BlockSpec((Cmid, 1), lambda n: (0, 0)),
            pl.BlockSpec((Cout, 9 * Cmid), lambda n: (0, 0)),
            pl.BlockSpec((9, HW, HW), lambda n: (0, 0, 0)),
        ],
        out_specs=pl.BlockSpec((1, Cout, HW), lambda n: (n, 0, 0)),
        compiler_params=pltpu.CompilerParams(dimension_semantics=("parallel",)),
    )(x, s1, b1, w1T, s2, b2, w2T, shift)


def _pallas_transition(x, s, b, wT, pool):
    N, Cin, HW = x.shape
    Cout = wT.shape[0]
    HW4 = pool.shape[1]
    return pl.pallas_call(
        _transition_kernel,
        out_shape=jax.ShapeDtypeStruct((N, Cout, HW4), jnp.float32),
        grid=(N,),
        in_specs=[
            pl.BlockSpec((1, Cin, HW), lambda n: (n, 0, 0)),
            pl.BlockSpec((Cin, 1), lambda n: (0, 0)),
            pl.BlockSpec((Cin, 1), lambda n: (0, 0)),
            pl.BlockSpec((Cout, Cin), lambda n: (0, 0)),
            pl.BlockSpec((HW, HW4), lambda n: (0, 0)),
        ],
        out_specs=pl.BlockSpec((1, Cout, HW4), lambda n: (n, 0, 0)),
        compiler_params=pltpu.CompilerParams(dimension_semantics=("parallel",)),
    )(x, s, b, wT, pool)


# --------------------------------- #
#  Model forward (Pallas path)      #
# --------------------------------- #
def _bn_scale_shift(bn):
    inv = 1.0 / jnp.sqrt(bn["var"] + BN_EPS)
    scale = bn["gamma"] * inv
    shift = bn["beta"] - bn["mean"] * scale
    return scale.reshape(-1, 1), shift.reshape(-1, 1)


def _sparse_block_fwd(x, p, H, W):
    # x: (N, Cin, H*W) channel-major
    s1, b1 = _bn_scale_shift(p["bn1"])
    s2, b2 = _bn_scale_shift(p["bn2"])
    w1T = p["w1"].T                                           # (Cmid, Cin)
    Cmid = w1T.shape[0]
    g = p["w2"].shape[-1]
    # (3,3,Cmid,Cout) HWIO -> (Cout, 9*Cmid), tap-major (t = 3*dy+dx), then cin.
    w2T = jnp.transpose(p["w2"], (3, 0, 1, 2)).reshape(g, 9 * Cmid)
    shift = jnp.asarray(_shift_matrices_np(H, W))
    return _pallas_sparse_block(x, s1, b1, w1T, s2, b2, w2T, shift)


def _transition_fwd(x, p, H, W):
    s, b = _bn_scale_shift(p["bn"])
    wT = p["w"].T                                             # (Cout, Cin)
    pool = jnp.asarray(_pool_matrix_np(H, W))
    return _pallas_transition(x, s, b, wT, pool)


def sparse_stage_forward_pallas(params, x_nchw, *, do_transition):
    N, C, H, W = x_nchw.shape
    x = x_nchw.reshape(N, C, H * W)          # channel-major, spatial on lanes
    if do_transition:
        x = _transition_fwd(x, params["trans"], H, W)
        H, W = H // 2, W // 2
    outs = [x]
    for bp in params["blocks"]:
        y = _sparse_block_fwd(x, bp, H, W)
        outs.append(y)
        flt_outs = sparsenet_exponential_fetch(outs)
        # TODO(synk): the fetch order changes each iteration, so this stays as
        # cheap channel-axis wrapper glue instead of a preallocated slab.
        x = jnp.concatenate(flt_outs, axis=1)  # == torch.cat(dim=1) in NCHW
    return x.reshape(N, -1, H, W)


# --------------------------------- #
#  Pure-JAX reference (no Pallas)   #
# --------------------------------- #
def _bn_relu_ref(x, bn):
    inv = 1.0 / jnp.sqrt(bn["var"] + BN_EPS)
    return jnp.maximum((x - bn["mean"]) * inv * bn["gamma"] + bn["beta"], 0.0)


def _sparse_block_ref(x, p):
    h = _bn_relu_ref(x, p["bn1"])
    h = jnp.einsum("nhwc,co->nhwo", h, p["w1"])
    a = _bn_relu_ref(h, p["bn2"])
    return lax.conv_general_dilated(a, p["w2"], (1, 1), "SAME",
                                    dimension_numbers=("NHWC", "HWIO", "NHWC"))


def _transition_ref(x, p):
    h = _bn_relu_ref(x, p["bn"])
    h = jnp.einsum("nhwc,co->nhwo", h, p["w"])
    N, H, W, C = h.shape
    return h.reshape(N, H // 2, 2, W // 2, 2, C).mean(axis=(2, 4))


def sparse_stage_forward_ref(params, x_nchw, *, do_transition):
    x = jnp.transpose(x_nchw, (0, 2, 3, 1))
    if do_transition:
        x = _transition_ref(x, params["trans"])
    outs = [x]
    for bp in params["blocks"]:
        y = _sparse_block_ref(x, bp)
        outs.append(y)
        flt_outs = sparsenet_exponential_fetch(outs)
        x = jnp.concatenate(flt_outs, axis=-1)
    return jnp.transpose(x, (0, 3, 1, 2))


# --------------------------------- #
#  Deterministic parameter init     #
# --------------------------------- #
def _init_bn(key, c):
    k1, k2, k3, k4 = jax.random.split(key, 4)
    return dict(
        gamma=jax.random.uniform(k1, (c,), jnp.float32, 0.5, 1.5),
        beta=0.1 * jax.random.normal(k2, (c,), dtype=jnp.float32),
        mean=0.1 * jax.random.normal(k3, (c,), dtype=jnp.float32),
        var=jax.random.uniform(k4, (c,), jnp.float32, 0.5, 1.5),
    )


def init_sparse_stage(key, in_channels, growth_rate, num_blocks, do_transition):
    params = {"blocks": []}
    if do_transition:
        key, k1, k2 = jax.random.split(key, 3)
        c_out = in_channels // 2
        params["trans"] = dict(
            bn=_init_bn(k1, in_channels),
            w=jax.random.normal(k2, (in_channels, c_out), jnp.float32)
            / np.sqrt(in_channels),
        )
        in_channels = c_out
    out_ch = [in_channels]
    channels_per_stage = []
    cin = in_channels
    for _ in range(num_blocks):
        mid = 4 * growth_rate  # bn_size = 4
        key, k1, k2, k3, k4 = jax.random.split(key, 5)
        params["blocks"].append(dict(
            bn1=_init_bn(k1, cin),
            w1=jax.random.normal(k2, (cin, mid), jnp.float32) / np.sqrt(cin),
            bn2=_init_bn(k3, mid),
            w2=jax.random.normal(k4, (3, 3, mid, growth_rate), jnp.float32)
            / np.sqrt(9 * mid),
        ))
        out_ch.append(growth_rate)
        cin = int(sum(sparsenet_exponential_fetch(out_ch)))
        channels_per_stage.append(cin)
    return params, channels_per_stage


# --------------------------------- #
#  Main                             #
# --------------------------------- #
if __name__ == "__main__":
    key = jax.random.PRNGKey(0)
    k_params, k_x = jax.random.split(key)

    N, C_in, H, W = 2, 8, 16, 16
    growth_rate = 4
    num_blocks = 3
    do_transition = True
    dropout_rate = 0.0  # -> use_dropout = False (identity)

    params, channels_per_stage = init_sparse_stage(
        k_params, C_in, growth_rate, num_blocks, do_transition)

    x = jax.random.normal(k_x, (N, C_in, H, W), dtype=jnp.float32)

    fwd = jax.jit(functools.partial(sparse_stage_forward_pallas,
                                    do_transition=do_transition))
    out = jax.block_until_ready(fwd(params, x))

    ref = jax.block_until_ready(
        sparse_stage_forward_ref(params, x, do_transition=do_transition))

    assert out.shape == ref.shape == (N, channels_per_stage[-1], H // 2, W // 2)
    np.testing.assert_allclose(np.asarray(out), np.asarray(ref),
                               rtol=1e-3, atol=1e-3)
    print("KERNEL_OK")
</pallas_src>

<mosaic_0001>
module attributes {stable_mosaic.version = 11 : i64} {
  func.func @_transition_kernel(%arg0: i32, %arg1: memref<1x8x256xf32, #tpu.memory_space<vmem>>, %arg2: memref<8x1xf32, #tpu.memory_space<vmem>>, %arg3: memref<8x1xf32, #tpu.memory_space<vmem>>, %arg4: memref<4x8xf32, #tpu.memory_space<vmem>>, %arg5: memref<256x64xf32, #tpu.memory_space<vmem>>, %arg6: memref<1x4x64xf32, #tpu.memory_space<vmem>>) attributes {dimension_semantics = [#tpu.dimension_semantics<parallel>], iteration_bounds = array<i64: 2>, scalar_prefetch = 0 : i64, scratch_operands = 0 : i64, tpu.core_type = #tpu.core_type<tc>, window_params = [{transform_indices = @transform_0, window_bounds = array<i64: 1, 8, 256>}, {pipeline_mode = #tpu.pipeline_mode<synchronous>, transform_indices = @transform_1, window_bounds = array<i64: 8, 1>}, {pipeline_mode = #tpu.pipeline_mode<synchronous>, transform_indices = @transform_2, window_bounds = array<i64: 8, 1>}, {pipeline_mode = #tpu.pipeline_mode<synchronous>, transform_indices = @transform_3, window_bounds = array<i64: 4, 8>}, {pipeline_mode = #tpu.pipeline_mode<synchronous>, transform_indices = @transform_4, window_bounds = array<i64: 256, 64>}, {transform_indices = @transform_5, window_bounds = array<i64: 1, 4, 64>}]} {
    %c0 = arith.constant 0 : index
    %c0_0 = arith.constant 0 : index
    %c0_1 = arith.constant 0 : index
    %0 = vector.load %arg1[%c0, %c0_0, %c0_1] : memref<1x8x256xf32, #tpu.memory_space<vmem>>, vector<1x8x256xf32>
    %1 = vector.shape_cast %0 : vector<1x8x256xf32> to vector<8x256xf32>
    %c0_2 = arith.constant 0 : index
    %c0_3 = arith.constant 0 : index
    %2 = vector.load %arg2[%c0_2, %c0_3] : memref<8x1xf32, #tpu.memory_space<vmem>>, vector<8x1xf32>
    %3 = vector.broadcast %2 : vector<8x1xf32> to vector<8x256xf32>
    %4 = arith.mulf %1, %3 : vector<8x256xf32>
    %c0_4 = arith.constant 0 : index
    %c0_5 = arith.constant 0 : index
    %5 = vector.load %arg3[%c0_4, %c0_5] : memref<8x1xf32, #tpu.memory_space<vmem>>, vector<8x1xf32>
    %6 = vector.broadcast %5 : vector<8x1xf32> to vector<8x256xf32>
    %7 = arith.addf %4, %6 : vector<8x256xf32>
    %cst = arith.constant 0.000000e+00 : f32
    %8 = vector.broadcast %cst : f32 to vector<8x256xf32>
    %9 = arith.maximumf %7, %8 : vector<8x256xf32>
    %c0_6 = arith.constant 0 : index
    %c0_7 = arith.constant 0 : index
    %10 = vector.load %arg4[%c0_6, %c0_7] : memref<4x8xf32, #tpu.memory_space<vmem>>, vector<4x8xf32>
    %cst_8 = arith.constant dense<0.000000e+00> : vector<4x256xf32>
    %11 = tpu.matmul %10, %9, %cst_8 {dimension_numbers = #tpu.dot_dimension_numbers<[1], [0], [0], [1], [0, 0, 1, 1], [], []>} : vector<4x8xf32>, vector<8x256xf32>, vector<4x256xf32> -> vector<4x256xf32>
    %c0_9 = arith.constant 0 : index
    %c0_10 = arith.constant 0 : index
    %12 = vector.load %arg5[%c0_9, %c0_10] : memref<256x64xf32, #tpu.memory_space<vmem>>, vector<256x64xf32>
    %cst_11 = arith.constant dense<0.000000e+00> : vector<4x64xf32>
    %13 = tpu.matmul %11, %12, %cst_11 {dimension_numbers = #tpu.dot_dimension_numbers<[1], [0], [0], [1], [0, 0, 1, 1], [], []>} : vector<4x256xf32>, vector<256x64xf32>, vector<4x64xf32> -> vector<4x64xf32>
    %c0_12 = arith.constant 0 : index
    %c0_13 = arith.constant 0 : index
    %c0_14 = arith.constant 0 : index
    %14 = vector.load %arg6[%c0_12, %c0_13, %c0_14] : memref<1x4x64xf32, #tpu.memory_space<vmem>>, vector<1x4x64xf32>
    %15 = vector.shape_cast %14 : vector<1x4x64xf32> to vector<4x64xf32>
    %16 = vector.shape_cast %13 : vector<4x64xf32> to vector<1x4x64xf32>
    tpu.vector_store %arg6[%c0_12, %c0_13, %c0_14], %16 {strides = array<i32>} : memref<1x4x64xf32, #tpu.memory_space<vmem>>, vector<1x4x64xf32>,
    return
  }
  func.func @transform_0(%arg0: i32) -> (i32, i32, i32) {
    %c0_i32 = arith.constant 0 : i32
    %c0_i32_0 = arith.constant 0 : i32
    %c0_i32_1 = arith.constant 0 : i32
    return %arg0, %c0_i32, %c0_i32_0 : i32, i32, i32
  }
  func.func @transform_1(%arg0: i32) -> (i32, i32) {
    %c0_i32 = arith.constant 0 : i32
    %c0_i32_0 = arith.constant 0 : i32
    %c0_i32_1 = arith.constant 0 : i32
    return %c0_i32, %c0_i32_0 : i32, i32
  }
  func.func @transform_2(%arg0: i32) -> (i32, i32) {
    %c0_i32 = arith.constant 0 : i32
    %c0_i32_0 = arith.constant 0 : i32
    %c0_i32_1 = arith.constant 0 : i32
    return %c0_i32, %c0_i32_0 : i32, i32
  }
  func.func @transform_3(%arg0: i32) -> (i32, i32) {
    %c0_i32 = arith.constant 0 : i32
    %c0_i32_0 = arith.constant 0 : i32
    %c0_i32_1 = arith.constant 0 : i32
    return %c0_i32, %c0_i32_0 : i32, i32
  }
  func.func @transform_4(%arg0: i32) -> (i32, i32) {
    %c0_i32 = arith.constant 0 : i32
    %c0_i32_0 = arith.constant 0 : i32
    %c0_i32_1 = arith.constant 0 : i32
    return %c0_i32, %c0_i32_0 : i32, i32
  }
  func.func @transform_5(%arg0: i32) -> (i32, i32, i32) {
    %c0_i32 = arith.constant 0 : i32
    %c0_i32_0 = arith.constant 0 : i32
    %c0_i32_1 = arith.constant 0 : i32
    return %arg0, %c0_i32, %c0_i32_0 : i32, i32, i32
  }
}

module attributes {stable_mosaic.version = 11 : i64} {
  func.func @_sparse_block_kernel(%arg0: i32, %arg1: memref<1x8x64xf32, #tpu.memory_space<vmem>>, %arg2: memref<8x1xf32, #tpu.memory_space<vmem>>, %arg3: memref<8x1xf32, #tpu.memory_space<vmem>>, %arg4: memref<16x8xf32, #tpu.memory_space<vmem>>, %arg5: memref<16x1xf32, #tpu.memory_space<vmem>>, %arg6: memref<16x1xf32, #tpu.memory_space<vmem>>, %arg7: memref<4x144xf32, #tpu.memory_space<vmem>>, %arg8: memref<9x64x64xf32, #tpu.memory_space<vmem>>, %arg9: memref<1x4x64xf32, #tpu.memory_space<vmem>>) attributes {dimension_semantics = [#tpu.dimension_semantics<parallel>], iteration_bounds = array<i64: 2>, scalar_prefetch = 0 : i64, scratch_operands = 0 : i64, tpu.core_type = #tpu.core_type<tc>, window_params = [{transform_indices = @transform_0, window_bounds = array<i64: 1, 8, 64>}, {pipeline_mode = #tpu.pipeline_mode<synchronous>, transform_indices = @transform_1, window_bounds = array<i64: 8, 1>}, {pipeline_mode = #tpu.pipeline_mode<synchronous>, transform_indices = @transform_2, window_bounds = array<i64: 8, 1>}, {pipeline_mode = #tpu.pipeline_mode<synchronous>, transform_indices = @transform_3, window_bounds = array<i64: 16, 8>}, {pipeline_mode = #tpu.pipeline_mode<synchronous>, transform_indices = @transform_4, window_bounds = array<i64: 16, 1>}, {pipeline_mode = #tpu.pipeline_mode<synchronous>, transform_indices = @transform_5, window_bounds = array<i64: 16, 1>}, {pipeline_mode = #tpu.pipeline_mode<synchronous>, transform_indices = @transform_6, window_bounds = array<i64: 4, 144>}, {pipeline_mode = #tpu.pipeline_mode<synchronous>, transform_indices = @transform_7, window_bounds = array<i64: 9, 64, 64>}, {transform_indices = @transform_8, window_bounds = array<i64: 1, 4, 64>}]} {
    %c0 = arith.constant 0 : index
    %c0_0 = arith.constant 0 : index
    %c0_1 = arith.constant 0 : index
    %0 = vector.load %arg1[%c0, %c0_0, %c0_1] : memref<1x8x64xf32, #tpu.memory_space<vmem>>, vector<1x8x64xf32>
    %1 = vector.shape_cast %0 : vector<1x8x64xf32> to vector<8x64xf32>
    %c0_2 = arith.constant 0 : index
    %c0_3 = arith.constant 0 : index
    %2 = vector.load %arg2[%c0_2, %c0_3] : memref<8x1xf32, #tpu.memory_space<vmem>>, vector<8x1xf32>
    %3 = vector.broadcast %2 : vector<8x1xf32> to vector<8x64xf32>
    %4 = arith.mulf %1, %3 : vector<8x64xf32>
    %c0_4 = arith.constant 0 : index
    %c0_5 = arith.constant 0 : index
    %5 = vector.load %arg3[%c0_4, %c0_5] : memref<8x1xf32, #tpu.memory_space<vmem>>, vector<8x1xf32>
    %6 = vector.broadcast %5 : vector<8x1xf32> to vector<8x64xf32>
    %7 = arith.addf %4, %6 : vector<8x64xf32>
    %cst = arith.constant 0.000000e+00 : f32
    %8 = vector.broadcast %cst : f32 to vector<8x64xf32>
    %9 = arith.maximumf %7, %8 : vector<8x64xf32>
    %c0_6 = arith.constant 0 : index
    %c0_7 = arith.constant 0 : index
    %10 = vector.load %arg4[%c0_6, %c0_7] : memref<16x8xf32, #tpu.memory_space<vmem>>, vector<16x8xf32>
    %cst_8 = arith.constant dense<0.000000e+00> : vector<16x64xf32>
    %11 = tpu.matmul %10, %9, %cst_8 {dimension_numbers = #tpu.dot_dimension_numbers<[1], [0], [0], [1], [0, 0, 1, 1], [], []>} : vector<16x8xf32>, vector<8x64xf32>, vector<16x64xf32> -> vector<16x64xf32>
    %c0_9 = arith.constant 0 : index
    %c0_10 = arith.constant 0 : index
    %12 = vector.load %arg5[%c0_9, %c0_10] : memref<16x1xf32, #tpu.memory_space<vmem>>, vector<16x1xf32>
    %13 = vector.broadcast %12 : vector<16x1xf32> to vector<16x64xf32>
    %14 = arith.mulf %11, %13 : vector<16x64xf32>
    %c0_11 = arith.constant 0 : index
    %c0_12 = arith.constant 0 : index
    %15 = vector.load %arg6[%c0_11, %c0_12] : memref<16x1xf32, #tpu.memory_space<vmem>>, vector<16x1xf32>
    %16 = vector.broadcast %15 : vector<16x1xf32> to vector<16x64xf32>
    %17 = arith.addf %14, %16 : vector<16x64xf32>
    %cst_13 = arith.constant 0.000000e+00 : f32
    %18 = vector.broadcast %cst_13 : f32 to vector<16x64xf32>
    %19 = arith.maximumf %17, %18 : vector<16x64xf32>
    %c0_14 = arith.constant 0 : index
    %c0_15 = arith.constant 0 : index
    %c0_16 = arith.constant 0 : index
    %20 = vector.load %arg8[%c0_14, %c0_15, %c0_16] : memref<9x64x64xf32, #tpu.memory_space<vmem>>, vector<1x64x64xf32>
    %21 = vector.shape_cast %20 : vector<1x64x64xf32> to vector<64x64xf32>
    %cst_17 = arith.constant dense<0.000000e+00> : vector<16x64xf32>
    %22 = tpu.matmul %19, %21, %cst_17 {dimension_numbers = #tpu.dot_dimension_numbers<[1], [0], [0], [1], [0, 0, 1, 1], [], []>} : vector<16x64xf32>, vector<64x64xf32>, vector<16x64xf32> -> vector<16x64xf32>
    %c1 = arith.constant 1 : index
    %c0_18 = arith.constant 0 : index
    %c0_19 = arith.constant 0 : index
    %23 = vector.load %arg8[%c1, %c0_18, %c0_19] : memref<9x64x64xf32, #tpu.memory_space<vmem>>, vector<1x64x64xf32>
    %24 = vector.shape_cast %23 : vector<1x64x64xf32> to vector<64x64xf32>
    %cst_20 = arith.constant dense<0.000000e+00> : vector<16x64xf32>
    %25 = tpu.matmul %19, %24, %cst_20 {dimension_numbers = #tpu.dot_dimension_numbers<[1], [0], [0], [1], [0, 0, 1, 1], [], []>} : vector<16x64xf32>, vector<64x64xf32>, vector<16x64xf32> -> vector<16x64xf32>
    %c2 = arith.constant 2 : index
    %c0_21 = arith.constant 0 : index
    %c0_22 = arith.constant 0 : index
    %26 = vector.load %arg8[%c2, %c0_21, %c0_22] : memref<9x64x64xf32, #tpu.memory_space<vmem>>, vector<1x64x64xf32>
    %27 = vector.shape_cast %26 : vector<1x64x64xf32> to vector<64x64xf32>
    %cst_23 = arith.constant dense<0.000000e+00> : vector<16x64xf32>
    %28 = tpu.matmul %19, %27, %cst_23 {dimension_numbers = #tpu.dot_dimension_numbers<[1], [0], [0], [1], [0, 0, 1, 1], [], []>} : vector<16x64xf32>, vector<64x64xf32>, vector<16x64xf32> -> vector<16x64xf32>
    %c3 = arith.constant 3 : index
    %c0_24 = arith.constant 0 : index
    %c0_25 = arith.constant 0 : index
    %29 = vector.load %arg8[%c3, %c0_24, %c0_25] : memref<9x64x64xf32, #tpu.memory_space<vmem>>, vector<1x64x64xf32>
    %30 = vector.shape_cast %29 : vector<1x64x64xf32> to vector<64x64xf32>
    %cst_26 = arith.constant dense<0.000000e+00> : vector<16x64xf32>
    %31 = tpu.matmul %19, %30, %cst_26 {dimension_numbers = #tpu.dot_dimension_numbers<[1], [0], [0], [1], [0, 0, 1, 1], [], []>} : vector<16x64xf32>, vector<64x64xf32>, vector<16x64xf32> -> vector<16x64xf32>
    %c4 = arith.constant 4 : index
    %c0_27 = arith.constant 0 : index
    %c0_28 = arith.constant 0 : index
    %32 = vector.load %arg8[%c4, %c0_27, %c0_28] : memref<9x64x64xf32, #tpu.memory_space<vmem>>, vector<1x64x64xf32>
    %33 = vector.shape_cast %32 : vector<1x64x64xf32> to vector<64x64xf32>
    %cst_29 = arith.constant dense<0.000000e+00> : vector<16x64xf32>
    %34 = tpu.matmul %19, %33, %cst_29 {dimension_numbers = #tpu.dot_dimension_numbers<[1], [0], [0], [1], [0, 0, 1, 1], [], []>} : vector<16x64xf32>, vector<64x64xf32>, vector<16x64xf32> -> vector<16x64xf32>
    %c5 = arith.constant 5 : index
    %c0_30 = arith.constant 0 : index
    %c0_31 = arith.constant 0 : index
    %35 = vector.load %arg8[%c5, %c0_30, %c0_31] : memref<9x64x64xf32, #tpu.memory_space<vmem>>, vector<1x64x64xf32>
    %36 = vector.shape_cast %35 : vector<1x64x64xf32> to vector<64x64xf32>
    %cst_32 = arith.constant dense<0.000000e+00> : vector<16x64xf32>
    %37 = tpu.matmul %19, %36, %cst_32 {dimension_numbers = #tpu.dot_dimension_numbers<[1], [0], [0], [1], [0, 0, 1, 1], [], []>} : vector<16x64xf32>, vector<64x64xf32>, vector<16x64xf32> -> vector<16x64xf32>
    %c6 = arith.constant 6 : index
    %c0_33 = arith.constant 0 : index
    %c0_34 = arith.constant 0 : index
    %38 = vector.load %arg8[%c6, %c0_33, %c0_34] : memref<9x64x64xf32, #tpu.memory_space<vmem>>, vector<1x64x64xf32>
    %39 = vector.shape_cast %38 : vector<1x64x64xf32> to vector<64x64xf32>
    %cst_35 = arith.constant dense<0.000000e+00> : vector<16x64xf32>
    %40 = tpu.matmul %19, %39, %cst_35 {dimension_numbers = #tpu.dot_dimension_numbers<[1], [0], [0], [1], [0, 0, 1, 1], [], []>} : vector<16x64xf32>, vector<64x64xf32>, vector<16x64xf32> -> vector<16x64xf32>
    %c7 = arith.constant 7 : index
    %c0_36 = arith.constant 0 : index
    %c0_37 = arith.constant 0 : index
    %41 = vector.load %arg8[%c7, %c0_36, %c0_37] : memref<9x64x64xf32, #tpu.memory_space<vmem>>, vector<1x64x64xf32>
    %42 = vector.shape_cast %41 : vector<1x64x64xf32> to vector<64x64xf32>
    %cst_38 = arith.constant dense<0.000000e+00> : vector<16x64xf32>
    %43 = tpu.matmul %19, %42, %cst_38 {dimension_numbers = #tpu.dot_dimension_numbers<[1], [0], [0], [1], [0, 0, 1, 1], [], []>} : vector<16x64xf32>, vector<64x64xf32>, vector<16x64xf32> -> vector<16x64xf32>
    %c8 = arith.constant 8 : index
    %c0_39 = arith.constant 0 : index
    %c0_40 = arith.constant 0 : index
    %44 = vector.load %arg8[%c8, %c0_39, %c0_40] : memref<9x64x64xf32, #tpu.memory_space<vmem>>, vector<1x64x64xf32>
    %45 = vector.shape_cast %44 : vector<1x64x64xf32> to vector<64x64xf32>
    %cst_41 = arith.constant dense<0.000000e+00> : vector<16x64xf32>
    %46 = tpu.matmul %19, %45, %cst_41 {dimension_numbers = #tpu.dot_dimension_numbers<[1], [0], [0], [1], [0, 0, 1, 1], [], []>} : vector<16x64xf32>, vector<64x64xf32>, vector<16x64xf32> -> vector<16x64xf32>
    %47 = tpu.concatenate %22, %25, %28, %31, %34, %37, %40, %43, %46 in 0 : vector<16x64xf32>, vector<16x64xf32>, vector<16x64xf32>, vector<16x64xf32>, vector<16x64xf32>, vector<16x64xf32>, vector<16x64xf32>, vector<16x64xf32>, vector<16x64xf32> -> vector<144x64xf32>
    %c0_42 = arith.constant 0 : index
    %c0_43 = arith.constant 0 : index
    %48 = vector.load %arg7[%c0_42, %c0_43] : memref<4x144xf32, #tpu.memory_space<vmem>>, vector<4x144xf32>
    %cst_44 = arith.constant dense<0.000000e+00> : vector<4x64xf32>
    %49 = tpu.matmul %48, %47, %cst_44 {dimension_numbers = #tpu.dot_dimension_numbers<[1], [0], [0], [1], [0, 0, 1, 1], [], []>} : vector<4x144xf32>, vector<144x64xf32>, vector<4x64xf32> -> vector<4x64xf32>
    %c0_45 = arith.constant 0 : index
    %c0_46 = arith.constant 0 : index
    %c0_47 = arith.constant 0 : index
    %50 = vector.load %arg9[%c0_45, %c0_46, %c0_47] : memref<1x4x64xf32, #tpu.memory_space<vmem>>, vector<1x4x64xf32>
    %51 = vector.shape_cast %50 : vector<1x4x64xf32> to vector<4x64xf32>
    %52 = vector.shape_cast %49 : vector<4x64xf32> to vector<1x4x64xf32>
    tpu.vector_store %arg9[%c0_45, %c0_46, %c0_47], %52 {strides = array<i32>} : memref<1x4x64xf32, #tpu.memory_space<vmem>>, vector<1x4x64xf32>,
    return
  }
  func.func @transform_0(%arg0: i32) -> (i32, i32, i32) {
    %c0_i32 = arith.constant 0 : i32
    %c0_i32_0 = arith.constant 0 : i32
    %c0_i32_1 = arith.constant 0 : i32
    return %arg0, %c0_i32, %c0_i32_0 : i32, i32, i32
  }
  func.func @transform_1(%arg0: i32) -> (i32, i32) {
    %c0_i32 = arith.constant 0 : i32
    %c0_i32_0 = arith.constant 0 : i32
    %c0_i32_1 = arith.constant 0 : i32
    return %c0_i32, %c0_i32_0 : i32, i32
  }
  func.func @transform_2(%arg0: i32) -> (i32, i32) {
    %c0_i32 = arith.constant 0 : i32
    %c0_i32_0 = arith.constant 0 : i32
    %c0_i32_1 = arith.constant 0 : i32
    return %c0_i32, %c0_i32_0 : i32, i32
  }
  func.func @transform_3(%arg0: i32) -> (i32, i32) {
    %c0_i32 = arith.constant 0 : i32
    %c0_i32_0 = arith.constant 0 : i32
    %c0_i32_1 = arith.constant 0 : i32
    return %c0_i32, %c0_i32_0 : i32, i32
  }
  func.func @transform_4(%arg0: i32) -> (i32, i32) {
    %c0_i32 = arith.constant 0 : i32
    %c0_i32_0 = arith.constant 0 : i32
    %c0_i32_1 = arith.constant 0 : i32
    return %c0_i32, %c0_i32_0 : i32, i32
  }
  func.func @transform_5(%arg0: i32) -> (i32, i32) {
    %c0_i32 = arith.constant 0 : i32
    %c0_i32_0 = arith.constant 0 : i32
    %c0_i32_1 = arith.constant 0 : i32
    return %c0_i32, %c0_i32_0 : i32, i32
  }
  func.func @transform_6(%arg0: i32) -> (i32, i32) {
    %c0_i32 = arith.constant 0 : i32
    %c0_i32_0 = arith.constant 0 : i32
    %c0_i32_1 = arith.constant 0 : i32
    return %c0_i32, %c0_i32_0 : i32, i32
  }
  func.func @transform_7(%arg0: i32) -> (i32, i32, i32) {
    %c0_i32 = arith.constant 0 : i32
    %c0_i32_0 = arith.constant 0 : i32
    %c0_i32_1 = arith.constant 0 : i32
    %c0_i32_2 = arith.constant 0 : i32
    return %c0_i32, %c0_i32_0, %c0_i32_1 : i32, i32, i32
  }
  func.func @transform_8(%arg0: i32) -> (i32, i32, i32) {
    %c0_i32 = arith.constant 0 : i32
    %c0_i32_0 = arith.constant 0 : i32
    %c0_i32_1 = arith.constant 0 : i32
    return %arg0, %c0_i32, %c0_i32_0 : i32, i32, i32
  }
}

module attributes {stable_mosaic.version = 11 : i64} {
  func.func @_sparse_block_kernel(%arg0: i32, %arg1: memref<1x4x64xf32, #tpu.memory_space<vmem>>, %arg2: memref<4x1xf32, #tpu.memory_space<vmem>>, %arg3: memref<4x1xf32, #tpu.memory_space<vmem>>, %arg4: memref<16x4xf32, #tpu.memory_space<vmem>>, %arg5: memref<16x1xf32, #tpu.memory_space<vmem>>, %arg6: memref<16x1xf32, #tpu.memory_space<vmem>>, %arg7: memref<4x144xf32, #tpu.memory_space<vmem>>, %arg8: memref<9x64x64xf32, #tpu.memory_space<vmem>>, %arg9: memref<1x4x64xf32, #tpu.memory_space<vmem>>) attributes {dimension_semantics = [#tpu.dimension_semantics<parallel>], iteration_bounds = array<i64: 2>, scalar_prefetch = 0 : i64, scratch_operands = 0 : i64, tpu.core_type = #tpu.core_type<tc>, window_params = [{transform_indices = @transform_0, window_bounds = array<i64: 1, 4, 64>}, {pipeline_mode = #tpu.pipeline_mode<synchronous>, transform_indices = @transform_1, window_bounds = array<i64: 4, 1>}, {pipeline_mode = #tpu.pipeline_mode<synchronous>, transform_indices = @transform_2, window_bounds = array<i64: 4, 1>}, {pipeline_mode = #tpu.pipeline_mode<synchronous>, transform_indices = @transform_3, window_bounds = array<i64: 16, 4>}, {pipeline_mode = #tpu.pipeline_mode<synchronous>, transform_indices = @transform_4, window_bounds = array<i64: 16, 1>}, {pipeline_mode = #tpu.pipeline_mode<synchronous>, transform_indices = @transform_5, window_bounds = array<i64: 16, 1>}, {pipeline_mode = #tpu.pipeline_mode<synchronous>, transform_indices = @transform_6, window_bounds = array<i64: 4, 144>}, {pipeline_mode = #tpu.pipeline_mode<synchronous>, transform_indices = @transform_7, window_bounds = array<i64: 9, 64, 64>}, {transform_indices = @transform_8, window_bounds = array<i64: 1, 4, 64>}]} {
    %c0 = arith.constant 0 : index
    %c0_0 = arith.constant 0 : index
    %c0_1 = arith.constant 0 : index
    %0 = vector.load %arg1[%c0, %c0_0, %c0_1] : memref<1x4x64xf32, #tpu.memory_space<vmem>>, vector<1x4x64xf32>
    %1 = vector.shape_cast %0 : vector<1x4x64xf32> to vector<4x64xf32>
    %c0_2 = arith.constant 0 : index
    %c0_3 = arith.constant 0 : index
    %2 = vector.load %arg2[%c0_2, %c0_3] : memref<4x1xf32, #tpu.memory_space<vmem>>, vector<4x1xf32>
    %3 = vector.broadcast %2 : vector<4x1xf32> to vector<4x64xf32>
    %4 = arith.mulf %1, %3 : vector<4x64xf32>
    %c0_4 = arith.constant 0 : index
    %c0_5 = arith.constant 0 : index
    %5 = vector.load %arg3[%c0_4, %c0_5] : memref<4x1xf32, #tpu.memory_space<vmem>>, vector<4x1xf32>
    %6 = vector.broadcast %5 : vector<4x1xf32> to vector<4x64xf32>
    %7 = arith.addf %4, %6 : vector<4x64xf32>
    %cst = arith.constant 0.000000e+00 : f32
    %8 = vector.broadcast %cst : f32 to vector<4x64xf32>
    %9 = arith.maximumf %7, %8 : vector<4x64xf32>
    %c0_6 = arith.constant 0 : index
    %c0_7 = arith.constant 0 : index
    %10 = vector.load %arg4[%c0_6, %c0_7] : memref<16x4xf32, #tpu.memory_space<vmem>>, vector<16x4xf32>
    %cst_8 = arith.constant dense<0.000000e+00> : vector<16x64xf32>
    %11 = tpu.matmul %10, %9, %cst_8 {dimension_numbers = #tpu.dot_dimension_numbers<[1], [0], [0], [1], [0, 0, 1, 1], [], []>} : vector<16x4xf32>, vector<4x64xf32>, vector<16x64xf32> -> vector<16x64xf32>
    %c0_9 = arith.constant 0 : index
    %c0_10 = arith.constant 0 : index
    %12 = vector.load %arg5[%c0_9, %c0_10] : memref<16x1xf32, #tpu.memory_space<vmem>>, vector<16x1xf32>
    %13 = vector.broadcast %12 : vector<16x1xf32> to vector<16x64xf32>
    %14 = arith.mulf %11, %13 : vector<16x64xf32>
    %c0_11 = arith.constant 0 : index
    %c0_12 = arith.constant 0 : index
    %15 = vector.load %arg6[%c0_11, %c0_12] : memref<16x1xf32, #tpu.memory_space<vmem>>, vector<16x1xf32>
    %16 = vector.broadcast %15 : vector<16x1xf32> to vector<16x64xf32>
    %17 = arith.addf %14, %16 : vector<16x64xf32>
    %cst_13 = arith.constant 0.000000e+00 : f32
    %18 = vector.broadcast %cst_13 : f32 to vector<16x64xf32>
    %19 = arith.maximumf %17, %18 : vector<16x64xf32>
    %c0_14 = arith.constant 0 : index
    %c0_15 = arith.constant 0 : index
    %c0_16 = arith.constant 0 : index
    %20 = vector.load %arg8[%c0_14, %c0_15, %c0_16] : memref<9x64x64xf32, #tpu.memory_space<vmem>>, vector<1x64x64xf32>
    %21 = vector.shape_cast %20 : vector<1x64x64xf32> to vector<64x64xf32>
    %cst_17 = arith.constant dense<0.000000e+00> : vector<16x64xf32>
    %22 = tpu.matmul %19, %21, %cst_17 {dimension_numbers = #tpu.dot_dimension_numbers<[1], [0], [0], [1], [0, 0, 1, 1], [], []>} : vector<16x64xf32>, vector<64x64xf32>, vector<16x64xf32> -> vector<16x64xf32>
    %c1 = arith.constant 1 : index
    %c0_18 = arith.constant 0 : index
    %c0_19 = arith.constant 0 : index
    %23 = vector.load %arg8[%c1, %c0_18, %c0_19] : memref<9x64x64xf32, #tpu.memory_space<vmem>>, vector<1x64x64xf32>
    %24 = vector.shape_cast %23 : vector<1x64x64xf32> to vector<64x64xf32>
    %cst_20 = arith.constant dense<0.000000e+00> : vector<16x64xf32>
    %25 = tpu.matmul %19, %24, %cst_20 {dimension_numbers = #tpu.dot_dimension_numbers<[1], [0], [0], [1], [0, 0, 1, 1], [], []>} : vector<16x64xf32>, vector<64x64xf32>, vector<16x64xf32> -> vector<16x64xf32>
    %c2 = arith.constant 2 : index
    %c0_21 = arith.constant 0 : index
    %c0_22 = arith.constant 0 : index
    %26 = vector.load %arg8[%c2, %c0_21, %c0_22] : memref<9x64x64xf32, #tpu.memory_space<vmem>>, vector<1x64x64xf32>
    %27 = vector.shape_cast %26 : vector<1x64x64xf32> to vector<64x64xf32>
    %cst_23 = arith.constant dense<0.000000e+00> : vector<16x64xf32>
    %28 = tpu.matmul %19, %27, %cst_23 {dimension_numbers = #tpu.dot_dimension_numbers<[1], [0], [0], [1], [0, 0, 1, 1], [], []>} : vector<16x64xf32>, vector<64x64xf32>, vector<16x64xf32> -> vector<16x64xf32>
    %c3 = arith.constant 3 : index
    %c0_24 = arith.constant 0 : index
    %c0_25 = arith.constant 0 : index
    %29 = vector.load %arg8[%c3, %c0_24, %c0_25] : memref<9x64x64xf32, #tpu.memory_space<vmem>>, vector<1x64x64xf32>
    %30 = vector.shape_cast %29 : vector<1x64x64xf32> to vector<64x64xf32>
    %cst_26 = arith.constant dense<0.000000e+00> : vector<16x64xf32>
    %31 = tpu.matmul %19, %30, %cst_26 {dimension_numbers = #tpu.dot_dimension_numbers<[1], [0], [0], [1], [0, 0, 1, 1], [], []>} : vector<16x64xf32>, vector<64x64xf32>, vector<16x64xf32> -> vector<16x64xf32>
    %c4 = arith.constant 4 : index
    %c0_27 = arith.constant 0 : index
    %c0_28 = arith.constant 0 : index
    %32 = vector.load %arg8[%c4, %c0_27, %c0_28] : memref<9x64x64xf32, #tpu.memory_space<vmem>>, vector<1x64x64xf32>
    %33 = vector.shape_cast %32 : vector<1x64x64xf32> to vector<64x64xf32>
    %cst_29 = arith.constant dense<0.000000e+00> : vector<16x64xf32>
    %34 = tpu.matmul %19, %33, %cst_29 {dimension_numbers = #tpu.dot_dimension_numbers<[1], [0], [0], [1], [0, 0, 1, 1], [], []>} : vector<16x64xf32>, vector<64x64xf32>, vector<16x64xf32> -> vector<16x64xf32>
    %c5 = arith.constant 5 : index
    %c0_30 = arith.constant 0 : index
    %c0_31 = arith.constant 0 : index
    %35 = vector.load %arg8[%c5, %c0_30, %c0_31] : memref<9x64x64xf32, #tpu.memory_space<vmem>>, vector<1x64x64xf32>
    %36 = vector.shape_cast %35 : vector<1x64x64xf32> to vector<64x64xf32>
    %cst_32 = arith.constant dense<0.000000e+00> : vector<16x64xf32>
    %37 = tpu.matmul %19, %36, %cst_32 {dimension_numbers = #tpu.dot_dimension_numbers<[1], [0], [0], [1], [0, 0, 1, 1], [], []>} : vector<16x64xf32>, vector<64x64xf32>, vector<16x64xf32> -> vector<16x64xf32>
    %c6 = arith.constant 6 : index
    %c0_33 = arith.constant 0 : index
    %c0_34 = arith.constant 0 : index
    %38 = vector.load %arg8[%c6, %c0_33, %c0_34] : memref<9x64x64xf32, #tpu.memory_space<vmem>>, vector<1x64x64xf32>
    %39 = vector.shape_cast %38 : vector<1x64x64xf32> to vector<64x64xf32>
    %cst_35 = arith.constant dense<0.000000e+00> : vector<16x64xf32>
    %40 = tpu.matmul %19, %39, %cst_35 {dimension_numbers = #tpu.dot_dimension_numbers<[1], [0], [0], [1], [0, 0, 1, 1], [], []>} : vector<16x64xf32>, vector<64x64xf32>, vector<16x64xf32> -> vector<16x64xf32>
    %c7 = arith.constant 7 : index
    %c0_36 = arith.constant 0 : index
    %c0_37 = arith.constant 0 : index
    %41 = vector.load %arg8[%c7, %c0_36, %c0_37] : memref<9x64x64xf32, #tpu.memory_space<vmem>>, vector<1x64x64xf32>
    %42 = vector.shape_cast %41 : vector<1x64x64xf32> to vector<64x64xf32>
    %cst_38 = arith.constant dense<0.000000e+00> : vector<16x64xf32>
    %43 = tpu.matmul %19, %42, %cst_38 {dimension_numbers = #tpu.dot_dimension_numbers<[1], [0], [0], [1], [0, 0, 1, 1], [], []>} : vector<16x64xf32>, vector<64x64xf32>, vector<16x64xf32> -> vector<16x64xf32>
    %c8 = arith.constant 8 : index
    %c0_39 = arith.constant 0 : index
    %c0_40 = arith.constant 0 : index
    %44 = vector.load %arg8[%c8, %c0_39, %c0_40] : memref<9x64x64xf32, #tpu.memory_space<vmem>>, vector<1x64x64xf32>
    %45 = vector.shape_cast %44 : vector<1x64x64xf32> to vector<64x64xf32>
    %cst_41 = arith.constant dense<0.000000e+00> : vector<16x64xf32>
    %46 = tpu.matmul %19, %45, %cst_41 {dimension_numbers = #tpu.dot_dimension_numbers<[1], [0], [0], [1], [0, 0, 1, 1], [], []>} : vector<16x64xf32>, vector<64x64xf32>, vector<16x64xf32> -> vector<16x64xf32>
    %47 = tpu.concatenate %22, %25, %28, %31, %34, %37, %40, %43, %46 in 0 : vector<16x64xf32>, vector<16x64xf32>, vector<16x64xf32>, vector<16x64xf32>, vector<16x64xf32>, vector<16x64xf32>, vector<16x64xf32>, vector<16x64xf32>, vector<16x64xf32> -> vector<144x64xf32>
    %c0_42 = arith.constant 0 : index
    %c0_43 = arith.constant 0 : index
    %48 = vector.load %arg7[%c0_42, %c0_43] : memref<4x144xf32, #tpu.memory_space<vmem>>, vector<4x144xf32>
    %cst_44 = arith.constant dense<0.000000e+00> : vector<4x64xf32>
    %49 = tpu.matmul %48, %47, %cst_44 {dimension_numbers = #tpu.dot_dimension_numbers<[1], [0], [0], [1], [0, 0, 1, 1], [], []>} : vector<4x144xf32>, vector<144x64xf32>, vector<4x64xf32> -> vector<4x64xf32>
    %c0_45 = arith.constant 0 : index
    %c0_46 = arith.constant 0 : index
    %c0_47 = arith.constant 0 : index
    %50 = vector.load %arg9[%c0_45, %c0_46, %c0_47] : memref<1x4x64xf32, #tpu.memory_space<vmem>>, vector<1x4x64xf32>
    %51 = vector.shape_cast %50 : vector<1x4x64xf32> to vector<4x64xf32>
    %52 = vector.shape_cast %49 : vector<4x64xf32> to vector<1x4x64xf32>
    tpu.vector_store %arg9[%c0_45, %c0_46, %c0_47], %52 {strides = array<i32>} : memref<1x4x64xf32, #tpu.memory_space<vmem>>, vector<1x4x64xf32>,
    return
  }
  func.func @transform_0(%arg0: i32) -> (i32, i32, i32) {
    %c0_i32 = arith.constant 0 : i32
    %c0_i32_0 = arith.constant 0 : i32
    %c0_i32_1 = arith.constant 0 : i32
    return %arg0, %c0_i32, %c0_i32_0 : i32, i32, i32
  }
  func.func @transform_1(%arg0: i32) -> (i32, i32) {
    %c0_i32 = arith.constant 0 : i32
    %c0_i32_0 = arith.constant 0 : i32
    %c0_i32_1 = arith.constant 0 : i32
    return %c0_i32, %c0_i32_0 : i32, i32
  }
  func.func @transform_2(%arg0: i32) -> (i32, i32) {
    %c0_i32 = arith.constant 0 : i32
    %c0_i32_0 = arith.constant 0 : i32
    %c0_i32_1 = arith.constant 0 : i32
    return %c0_i32, %c0_i32_0 : i32, i32
  }
  func.func @transform_3(%arg0: i32) -> (i32, i32) {
    %c0_i32 = arith.constant 0 : i32
    %c0_i32_0 = arith.constant 0 : i32
    %c0_i32_1 = arith.constant 0 : i32
    return %c0_i32, %c0_i32_0 : i32, i32
  }
  func.func @transform_4(%arg0: i32) -> (i32, i32) {
    %c0_i32 = arith.constant 0 : i32
    %c0_i32_0 = arith.constant 0 : i32
    %c0_i32_1 = arith.constant 0 : i32
    return %c0_i32, %c0_i32_0 : i32, i32
  }
  func.func @transform_5(%arg0: i32) -> (i32, i32) {
    %c0_i32 = arith.constant 0 : i32
    %c0_i32_0 = arith.constant 0 : i32
    %c0_i32_1 = arith.constant 0 : i32
    return %c0_i32, %c0_i32_0 : i32, i32
  }
  func.func @transform_6(%arg0: i32) -> (i32, i32) {
    %c0_i32 = arith.constant 0 : i32
    %c0_i32_0 = arith.constant 0 : i32
    %c0_i32_1 = arith.constant 0 : i32
    return %c0_i32, %c0_i32_0 : i32, i32
  }
  func.func @transform_7(%arg0: i32) -> (i32, i32, i32) {
    %c0_i32 = arith.constant 0 : i32
    %c0_i32_0 = arith.constant 0 : i32
    %c0_i32_1 = arith.constant 0 : i32
    %c0_i32_2 = arith.constant 0 : i32
    return %c0_i32, %c0_i32_0, %c0_i32_1 : i32, i32, i32
  }
  func.func @transform_8(%arg0: i32) -> (i32, i32, i32) {
    %c0_i32 = arith.constant 0 : i32
    %c0_i32_0 = arith.constant 0 : i32
    %c0_i32_1 = arith.constant 0 : i32
    return %arg0, %c0_i32, %c0_i32_0 : i32, i32, i32
  }
}

</mosaic_0001>

<llo_original>
// kernel: sparse_stage_forward_pallas.4
$region0: #{sparse_stage_forward_pallas.4}
  #allocation0 [shape = 'u32[]', space=smem, size = 0x4, offset = 0x4, fixed_abs, tag = 'smem constant byte address 0x4 - core index']
  #allocation1 [shape = 'u32[72,128]{1,0:T(1,128)}', space=vmem, size = 0x9000, scoped, tag = 'internal scratch']
  %s0 = inlined_call_operand.vmem [shape: f32[2,8,256], index: 0, kind: input, shape index: {}]
  %s1 = inlined_call_operand.vmem [shape: f32[8,1], index: 1, kind: input, shape index: {}]
  %s2 = inlined_call_operand.vmem [shape: f32[8,1], index: 2, kind: input, shape index: {}]
  %s3 = inlined_call_operand.vmem [shape: f32[4,8], index: 3, kind: input, shape index: {}]
  %s4 = inlined_call_operand.vmem [shape: f32[256,64], index: 4, kind: input, shape index: {}]
  %s5 = inlined_call_operand.vmem [shape: f32[2,4,64], index: 5, kind: output, shape index: {}]
  %s6 = sld [smem:[#allocation0]]
  $region53: #{sparse_stage_forward_pallas.4} parent=0
    _
  %s8 = ssub.s32 1, %s6
  %s9 = scalar_select 0, %s8, %s6
  loop: start=0, step=1, limit=4
  $region2: #{sparse_stage_forward_pallas.4} parent=0 // loop_pre_header
    _
  $region3: #{sparse_stage_forward_pallas.4} parent=0 // loop_header
    %s11 = sphi 0, %s15
    %p12 = scmp.ge.s32.totalorder %s11, 4
    %s21 = sphi 0, %s23
    %s24 = sphi 0, %s21
    %s25 = sphi 0, %s24
    %s41 = sphi 0, %s25
    %s45 = sphi 0, %s45
    %s47 = sphi 0, %s45
    %s48 = sphi 0, %s47
    %s62 = sphi 0, %s48
    %s66 = sphi 0, %s66
    %s68 = sphi 0, %s66
    %s69 = sphi 0, %s68
    %s83 = sphi 0, %s69
    %s87 = sphi 0, %s87
    %s89 = sphi 0, %s87
    %s90 = sphi 0, %s89
    %s104 = sphi 0, %s90
    %s108 = sphi 0, %s108
    %s110 = sphi 0, %s108
    %s111 = sphi 0, %s110
    %s125 = sphi 0, %s111
    %s131 = sphi 0, %s133
    %s134 = sphi 0, %s131
    %s135 = sphi 0, %s134
    %s151 = sphi 0, %s135
  $region4: #{sparse_stage_forward_pallas.4} parent=0 // loop_header_branch
    %14 = sbr.rel (%p12) target = $region8
  $region5: #{sparse_stage_forward_pallas.4} parent=0 // loop_body
    %s16 = ssub.s32 %s11, 1
    %s17 = ssub.s32 %s11, 2
    %s18 = sadd.s32 %s11, 1
    %s19 = ssub.s32 %s11, %s18
    %p20 = scmp.eq.s32.totalorder %s19, 0
    %s22 = sadd.s32 %s21, 1
    %s23 = scalar_select %p20, %s21, %s22
    %p26 = pneg %p20
    %p27 = scmp.eq.s32.totalorder %s11, 1
    %p28 = por %p26, %p27
    %p29 = scmp.ne.s32.totalorder %s21, %s24
    %p30 = scmp.eq.s32.totalorder %s11, 0
    %p31 = por %p29, %p30
    %p32 = scmp.ne.s32.totalorder %s21, %s24
    %p33 = scmp.eq.s32.totalorder %s16, 1
    %p34 = por %p32, %p33
    %p35 = scmp.ne.s32.totalorder %s24, %s25
    %p36 = scmp.eq.s32.totalorder %s16, 0
    %p37 = por %p35, %p36
    %p38 = scmp.ne.s32.totalorder %s24, %s25
    %p39 = scmp.eq.s32.totalorder %s17, 1
    %p40 = por %p38, %p39
    %p42 = scmp.ne.s32.totalorder %s25, %s41
    %p43 = scmp.eq.s32.totalorder %s17, 0
    %p44 = por %p42, %p43
    %s46 = sadd.s32 %s45, 1
    %p49 = scmp.eq.s32.totalorder %s11, 1
    %p50 = scmp.ne.s32.totalorder %s45, %s47
    %p51 = scmp.eq.s32.totalorder %s11, 0
    %p52 = por %p50, %p51
    %p53 = scmp.ne.s32.totalorder %s45, %s47
    %p54 = scmp.eq.s32.totalorder %s16, 1
    %p55 = por %p53, %p54
    %p56 = scmp.ne.s32.totalorder %s47, %s48
    %p57 = scmp.eq.s32.totalorder %s16, 0
    %p58 = por %p56, %p57
    %p59 = scmp.ne.s32.totalorder %s47, %s48
    %p60 = scmp.eq.s32.totalorder %s17, 1
    %p61 = por %p59, %p60
    %p63 = scmp.ne.s32.totalorder %s48, %s62
    %p64 = scmp.eq.s32.totalorder %s17, 0
    %p65 = por %p63, %p64
    %s67 = sadd.s32 %s66, 1
    %p70 = scmp.eq.s32.totalorder %s11, 1
    %p71 = scmp.ne.s32.totalorder %s66, %s68
    %p72 = scmp.eq.s32.totalorder %s11, 0
    %p73 = por %p71, %p72
    %p74 = scmp.ne.s32.totalorder %s66, %s68
    %p75 = scmp.eq.s32.totalorder %s16, 1
    %p76 = por %p74, %p75
    %p77 = scmp.ne.s32.totalorder %s68, %s69
    %p78 = scmp.eq.s32.totalorder %s16, 0
    %p79 = por %p77, %p78
    %p80 = scmp.ne.s32.totalorder %s68, %s69
    %p81 = scmp.eq.s32.totalorder %s17, 1
    %p82 = por %p80, %p81
    %p84 = scmp.ne.s32.totalorder %s69, %s83
    %p85 = scmp.eq.s32.totalorder %s17, 0
    %p86 = por %p84, %p85
    %s88 = sadd.s32 %s87, 1
    %p91 = scmp.eq.s32.totalorder %s11, 1
    %p92 = scmp.ne.s32.totalorder %s87, %s89
    %p93 = scmp.eq.s32.totalorder %s11, 0
    %p94 = por %p92, %p93
    %p95 = scmp.ne.s32.totalorder %s87, %s89
    %p96 = scmp.eq.s32.totalorder %s16, 1
    %p97 = por %p95, %p96
    %p98 = scmp.ne.s32.totalorder %s89, %s90
    %p99 = scmp.eq.s32.totalorder %s16, 0
    %p100 = por %p98, %p99
    %p101 = scmp.ne.s32.totalorder %s89, %s90
    %p102 = scmp.eq.s32.totalorder %s17, 1
    %p103 = por %p101, %p102
    %p105 = scmp.ne.s32.totalorder %s90, %s104
    %p106 = scmp.eq.s32.totalorder %s17, 0
    %p107 = por %p105, %p106
    %s109 = sadd.s32 %s108, 1
    %p112 = scmp.eq.s32.totalorder %s11, 1
    %p113 = scmp.ne.s32.totalorder %s108, %s110
    %p114 = scmp.eq.s32.totalorder %s11, 0
    %p115 = por %p113, %p114
    %p116 = scmp.ne.s32.totalorder %s108, %s110
    %p117 = scmp.eq.s32.totalorder %s16, 1
    %p118 = por %p116, %p117
    %p119 = scmp.ne.s32.totalorder %s110, %s111
    %p120 = scmp.eq.s32.totalorder %s16, 0
    %p121 = por %p119, %p120
    %p122 = scmp.ne.s32.totalorder %s110, %s111
    %p123 = scmp.eq.s32.totalorder %s17, 1
    %p124 = por %p122, %p123
    %p126 = scmp.ne.s32.totalorder %s111, %s125
    %p127 = scmp.eq.s32.totalorder %s17, 0
    %p128 = por %p126, %p127
    %s129 = ssub.s32 %s11, %s18
    %p130 = scmp.eq.s32.totalorder %s129, 0
    %s132 = sadd.s32 %s131, 1
    %s133 = scalar_select %p130, %s131, %s132
    %p136 = pneg %p130
    %p137 = scmp.eq.s32.totalorder %s11, 1
    %p138 = por %p136, %p137
    %p139 = scmp.ne.s32.totalorder %s131, %s134
    %p140 = scmp.eq.s32.totalorder %s11, 0
    %p141 = por %p139, %p140
    %p142 = scmp.ne.s32.totalorder %s131, %s134
    %p143 = scmp.eq.s32.totalorder %s16, 1
    %p144 = por %p142, %p143
    %p145 = scmp.ne.s32.totalorder %s134, %s135
    %p146 = scmp.eq.s32.totalorder %s16, 0
    %p147 = por %p145, %p146
    %p148 = scmp.ne.s32.totalorder %s134, %s135
    %p149 = scmp.eq.s32.totalorder %s17, 1
    %p150 = por %p148, %p149
    %p152 = scmp.ne.s32.totalorder %s135, %s151
    %p153 = scmp.eq.s32.totalorder %s17, 0
    %p154 = por %p152, %p153
    %p155 = scmp.le.s32.totalorder 1, %s11
    %p156 = scmp.lt.s32.totalorder %s11, 3
    %p157 = pnand %p155, %p156
    %p158 = pneg %p157
    // Predicated region
    $region9: #{sparse_stage_forward_pallas.4} parent=5 // pred_check
      _
    $region10: #{sparse_stage_forward_pallas.4} parent=5 // pred_check_branch
      %160 = sbr.rel (%p157) target = $region12
    $region11: #{sparse_stage_forward_pallas.4} parent=5 // pred_region
      %s161 = ssub.s32 %s11, 1
      // Predicated region
      $region13: #{sparse_stage_forward_pallas.4} parent=11 // pred_check
        %p162 = pneg %p58
      $region14: #{sparse_stage_forward_pallas.4} parent=11 // pred_check_branch
        %164 = sbr.rel (%p162) target = $region16
      $region15: #{sparse_stage_forward_pallas.4} parent=11 // pred_region
        _
      $region16: #{sparse_stage_forward_pallas.4} parent=11 // pred_fallthru
        _
      // Predicated region
      $region17: #{sparse_stage_forward_pallas.4} parent=11 // pred_check
        %p165 = pneg %p79
      $region18: #{sparse_stage_forward_pallas.4} parent=11 // pred_check_branch
        %167 = sbr.rel (%p165) target = $region20
      $region19: #{sparse_stage_forward_pallas.4} parent=11 // pred_region
        _
      $region20: #{sparse_stage_forward_pallas.4} parent=11 // pred_fallthru
        _
      // Predicated region
      $region21: #{sparse_stage_forward_pallas.4} parent=11 // pred_check
        %p168 = pneg %p100
      $region22: #{sparse_stage_forward_pallas.4} parent=11 // pred_check_branch
        %170 = sbr.rel (%p168) target = $region24
      $region23: #{sparse_stage_forward_pallas.4} parent=11 // pred_region
        _
      $region24: #{sparse_stage_forward_pallas.4} parent=11 // pred_fallthru
        _
      // Predicated region
      $region25: #{sparse_stage_forward_pallas.4} parent=11 // pred_check
        %p171 = pneg %p121
      $region26: #{sparse_stage_forward_pallas.4} parent=11 // pred_check_branch
        %173 = sbr.rel (%p171) target = $region28
      $region27: #{sparse_stage_forward_pallas.4} parent=11 // pred_region
        _
      $region28: #{sparse_stage_forward_pallas.4} parent=11 // pred_fallthru
        _
    $region12: #{sparse_stage_forward_pallas.4} parent=5 // pred_fallthru
      _
    %p174 = scmp.lt.s32.totalorder %s11, 2
    // Predicated region
    $region29: #{sparse_stage_forward_pallas.4} parent=5 // pred_check
      %p175 = pneg %p174
    $region30: #{sparse_stage_forward_pallas.4} parent=5 // pred_check_branch
      %177 = sbr.rel (%p175) target = $region32
    $region31: #{sparse_stage_forward_pallas.4} parent=5 // pred_region
      // Predicated region
      $region33: #{sparse_stage_forward_pallas.4} parent=31 // pred_check
        %p178 = pneg %p31
      $region34: #{sparse_stage_forward_pallas.4} parent=31 // pred_check_branch
        %180 = sbr.rel (%p178) target = $region36
      $region35: #{sparse_stage_forward_pallas.4} parent=31 // pred_region
        %p181 = scmp.lt.s32.totalorder %s11, 1
        %s182 = scalar_select %p181, %s11, 1
        %s183 = smul.addr %s182, 2
        %s184 = smul.addr %s183, 8
        %s185 = scalar_lea.vmem %s0, %s184
      $region36: #{sparse_stage_forward_pallas.4} parent=31 // pred_fallthru
        _
    $region32: #{sparse_stage_forward_pallas.4} parent=5 // pred_fallthru
      _
    %p186 = scmp.le.s32.totalorder 1, %s11
    %p187 = scmp.lt.s32.totalorder %s11, 3
    %p188 = pnand %p186, %p187
    %p189 = pneg %p188
    // Predicated region
    $region37: #{sparse_stage_forward_pallas.4} parent=5 // pred_check
      _
    $region38: #{sparse_stage_forward_pallas.4} parent=5 // pred_check_branch
      %191 = sbr.rel (%p188) target = $region40
    $region39: #{sparse_stage_forward_pallas.4} parent=5 // pred_region
      %s192 = ssub.s32 %s11, 1
      %p193 = scmp.lt.s32.totalorder %s16, 1
      %s194 = scalar_select %p193, %s16, 1
      %s195 = smul.addr %s194, 2
      %s196 = smul.addr %s195, 8
      %s197 = scalar_lea.vmem %s0, %s196
      %p198 = pneg %p37
      %p199 = pneg %p34
      %p200 = pneg %p58
      %p201 = pneg %p55
      %p202 = pneg %p79
      %p203 = pneg %p76
      %p204 = pneg %p100
      %p205 = pneg %p97
      %p206 = pneg %p121
      %p207 = pneg %p118
      %p208 = pneg %p147
      %p209 = pneg %p144
      %p210 = scmp.lt.s32.totalorder %s16, 1
      %s211 = scalar_select %p210, %s16, 1
      %s212 = smul.addr %s211, 4
      %s213 = scalar_lea.vmem %s5, %s212
      %p214 = scmp.lt.s32.totalorder %s16, 1
      %s215 = scalar_select %p214, %s16, 1
      %s216 = smul.addr %s215, 2
      %s217 = smul.addr %s216, 8
      %s218 = scalar_lea.vmem %s0, %s217
      %p219 = scmp.lt.s32.totalorder %s16, 1
      %s220 = scalar_select %p219, %s16, 1
      %s221 = smul.addr %s220, 4
      %s222 = scalar_lea.vmem %s5, %s221
      %v223 = vld [vmem:[%s218] sm:$0xff]
      %v224 = vld [vmem:[%s218 + $0x8] sm:$0xff]
      %v225 = vld [vmem:[%s1] sm:$0xff]
      %227 = vset.pattern.permute.xlu0 0
      %228 = vperm.xlu0 %227, %v225
      %v229 = vpop.permute.xlu0 %228
      %v231 = vmul.f32 %v223, %v229
      %v232 = vmul.f32 %v224, %v229
      %v233 = vld [vmem:[%s2] sm:$0xff]
      %235 = vset.pattern.permute.xlu0 0
      %236 = vperm.xlu0 %235, %v233
      %v237 = vpop.permute.xlu0 %236
      %v239 = vadd.f32 %v231, %v237
      %v240 = vadd.f32 %v232, %v237
      %v241 = vmax.f32 %v239, 0.0
      %v242 = vmax.f32 %v240, 0.0
      %v243 = vld [vmem:[%s3] sm:$0xf]
      %vm244 = vcmask 64512
      %v246 = vsel %vm244, %v243, 0
      %248 = vmatpush.msra.mxu0 0.0
      %249 = vmatpush.msra.mxu0 0.0
      %250 = vmatpush.msra.mxu0 0.0
      %251 = vmatpush.msra.mxu0 0.0
      %252 = vmatpush.msra.mxu0 0.0
      %253 = vmatpush.msra.mxu0 0.0
      %254 = vmatpush.msra.mxu0 0.0
      %255 = vmatpush.msra.mxu0 0.0
      %256 = vmatpush.msra.mxu0 0.0
      %257 = vmatpush.msra.mxu0 0.0
      %258 = vmatpush.msra.mxu0 0.0
      %259 = vmatpush.msra.mxu0 0.0
      %260 = vmatpush.msra.mxu0 0.0
      %261 = vmatpush.msra.mxu0 0.0
      %262 = vmatpush.msra.mxu0 0.0
      %263 = vmatpush.msra.mxu0 %v241
      %264 = vmatmul.f32.gmra.mxu0 %v246
      %v265 = vpop.f32.mrf.mxu0
      %v266 = vadd.f32 0.0, %v265
      %267 = vdwg.mxu0
      %268 = vmatpush.msra.mxu0 0.0
      %269 = vmatpush.msra.mxu0 0.0
      %270 = vmatpush.msra.mxu0 0.0
      %271 = vmatpush.msra.mxu0 0.0
      %272 = vmatpush.msra.mxu0 0.0
      %273 = vmatpush.msra.mxu0 0.0
      %274 = vmatpush.msra.mxu0 0.0
      %275 = vmatpush.msra.mxu0 0.0
      %276 = vmatpush.msra.mxu0 0.0
      %277 = vmatpush.msra.mxu0 0.0
      %278 = vmatpush.msra.mxu0 0.0
      %279 = vmatpush.msra.mxu0 0.0
      %280 = vmatpush.msra.mxu0 0.0
      %281 = vmatpush.msra.mxu0 0.0
      %282 = vmatpush.msra.mxu0 0.0
      %283 = vmatpush.msra.mxu0 %v242
      %284 = vmatmul.f32.gmra.mxu0 %v246
      %v285 = vpop.f32.mrf.mxu0
      %v286 = vadd.f32 0.0, %v285
      %287 = vdwg.mxu0
      %v288 = vld [vmem:[%s4] sm:$0xff]
      %v289 = vld [vmem:[%s4 + $0x8] sm:$0xff]
      %v290 = vld [vmem:[%s4 + $0x10] sm:$0xff]
      %v291 = vld [vmem:[%s4 + $0x18] sm:$0xff]
      %v292 = vld [vmem:[%s4 + $0x20] sm:$0xff]
      %v293 = vld [vmem:[%s4 + $0x28] sm:$0xff]
      %v294 = vld [vmem:[%s4 + $0x30] sm:$0xff]
      %v295 = vld [vmem:[%s4 + $0x38] sm:$0xff]
      %v296 = vld [vmem:[%s4 + $0x40] sm:$0xff]
      %v297 = vld [vmem:[%s4 + $0x48] sm:$0xff]
      %v298 = vld [vmem:[%s4 + $0x50] sm:$0xff]
      %v299 = vld [vmem:[%s4 + $0x58] sm:$0xff]
      %v300 = vld [vmem:[%s4 + $0x60] sm:$0xff]
      %v301 = vld [vmem:[%s4 + $0x68] sm:$0xff]
      %v302 = vld [vmem:[%s4 + $0x70] sm:$0xff]
      %v303 = vld [vmem:[%s4 + $0x78] sm:$0xff]
      %v304 = vld [vmem:[%s4 + $0x80] sm:$0xff]
      %v305 = vld [vmem:[%s4 + $0x88] sm:$0xff]
      %v306 = vld [vmem:[%s4 + $0x90] sm:$0xff]
      %v307 = vld [vmem:[%s4 + $0x98] sm:$0xff]
      %v308 = vld [vmem:[%s4 + $0xa0] sm:$0xff]
      %v309 = vld [vmem:[%s4 + $0xa8] sm:$0xff]
      %v310 = vld [vmem:[%s4 + $0xb0] sm:$0xff]
      %v311 = vld [vmem:[%s4 + $0xb8] sm:$0xff]
      %v312 = vld [vmem:[%s4 + $0xc0] sm:$0xff]
      %v313 = vld [vmem:[%s4 + $0xc8] sm:$0xff]
      %v314 = vld [vmem:[%s4 + $0xd0] sm:$0xff]
      %v315 = vld [vmem:[%s4 + $0xd8] sm:$0xff]
      %v316 = vld [vmem:[%s4 + $0xe0] sm:$0xff]
      %v317 = vld [vmem:[%s4 + $0xe8] sm:$0xff]
      %v318 = vld [vmem:[%s4 + $0xf0] sm:$0xff]
      %v319 = vld [vmem:[%s4 + $0xf8] sm:$0xff]
      %320 = vmatpush.msra.mxu0 %v303
      %321 = vmatpush.msra.mxu0 %v302
      %322 = vmatpush.msra.mxu0 %v301
      %323 = vmatpush.msra.mxu0 %v300
      %324 = vmatpush.msra.mxu0 %v299
      %325 = vmatpush.msra.mxu0 %v298
      %326 = vmatpush.msra.mxu0 %v297
      %327 = vmatpush.msra.mxu0 %v296
      %328 = vmatpush.msra.mxu0 %v295
      %329 = vmatpush.msra.mxu0 %v294
      %330 = vmatpush.msra.mxu0 %v293
      %331 = vmatpush.msra.mxu0 %v292
      %332 = vmatpush.msra.mxu0 %v291
      %333 = vmatpush.msra.mxu0 %v290
      %334 = vmatpush.msra.mxu0 %v289
      %335 = vmatpush.msra.mxu0 %v288
      %336 = vmatmul.f32.gmra.mxu0 %v266
      %v337 = vpop.f32.mrf.mxu0
      %v338 = vadd.f32 0.0, %v337
      %339 = vdwg.mxu0
      %340 = vmatpush.msra.mxu0 %v319
      %341 = vmatpush.msra.mxu0 %v318
      %342 = vmatpush.msra.mxu0 %v317
      %343 = vmatpush.msra.mxu0 %v316
      %344 = vmatpush.msra.mxu0 %v315
      %345 = vmatpush.msra.mxu0 %v314
      %346 = vmatpush.msra.mxu0 %v313
      %347 = vmatpush.msra.mxu0 %v312
      %348 = vmatpush.msra.mxu0 %v311
      %349 = vmatpush.msra.mxu0 %v310
      %350 = vmatpush.msra.mxu0 %v309
      %351 = vmatpush.msra.mxu0 %v308
      %352 = vmatpush.msra.mxu0 %v307
      %353 = vmatpush.msra.mxu0 %v306
      %354 = vmatpush.msra.mxu0 %v305
      %355 = vmatpush.msra.mxu0 %v304
      %356 = vmatmul.f32.gmra.mxu0 %v286
      %v357 = vpop.f32.mrf.mxu0
      %v358 = vadd.f32 %v338, %v357
      %359 = vdwg.mxu0
      %vm360 = vcmask 519168
      %361 = vst.msk [vmem:[%s222] sm:$0xf] %vm360, %v358
      %p362 = scmp.lt.s32.totalorder %s16, 1
      %s363 = scalar_select %p362, %s16, 1
      %s364 = smul.addr %s363, 4
      %s365 = scalar_lea.vmem %s5, %s364
      // Predicated region
      $region41: #{sparse_stage_forward_pallas.4} parent=39 // pred_check
        %p366 = pneg %p144
      $region42: #{sparse_stage_forward_pallas.4} parent=39 // pred_check_branch
        %368 = sbr.rel (%p366) target = $region44
      $region43: #{sparse_stage_forward_pallas.4} parent=39 // pred_region
        _
      $region44: #{sparse_stage_forward_pallas.4} parent=39 // pred_fallthru
        _
    $region40: #{sparse_stage_forward_pallas.4} parent=5 // pred_fallthru
      _
    %p369 = scmp.le.s32.totalorder 2, %s11
    // Predicated region
    $region45: #{sparse_stage_forward_pallas.4} parent=5 // pred_check
      %p370 = pneg %p369
    $region46: #{sparse_stage_forward_pallas.4} parent=5 // pred_check_branch
      %372 = sbr.rel (%p370) target = $region48
    $region47: #{sparse_stage_forward_pallas.4} parent=5 // pred_region
      %s373 = ssub.s32 %s11, 2
      // Predicated region
      $region49: #{sparse_stage_forward_pallas.4} parent=47 // pred_check
        %p374 = pneg %p150
      $region50: #{sparse_stage_forward_pallas.4} parent=47 // pred_check_branch
        %376 = sbr.rel (%p374) target = $region52
      $region51: #{sparse_stage_forward_pallas.4} parent=47 // pred_region
        %p377 = scmp.lt.s32.totalorder %s17, 1
        %s378 = scalar_select %p377, %s17, 1
        %s379 = smul.addr %s378, 4
        %s380 = scalar_lea.vmem %s5, %s379
      $region52: #{sparse_stage_forward_pallas.4} parent=47 // pred_fallthru
        _
    $region48: #{sparse_stage_forward_pallas.4} parent=5 // pred_fallthru
      _
  $region6: #{sparse_stage_forward_pallas.4} parent=0 // loop_footer
    %s15 = sadd.s32 1, %s11
  $region7: #{sparse_stage_forward_pallas.4} parent=0 // loop_footer_branch
    %10 = sbr.rel target = $region3
  $region8: #{sparse_stage_forward_pallas.4} parent=0 // loop_exit
    _

// kernel: sparse_stage_forward_pallas.6
$region0: #{sparse_stage_forward_pallas.6}
  #allocation0 [shape = 'u32[]', space=smem, size = 0x4, offset = 0x4, fixed_abs, tag = 'smem constant byte address 0x4 - core index']
  #allocation1 [shape = 'u32[72,128]{1,0:T(1,128)}', space=vmem, size = 0x9000, scoped, tag = 'internal scratch']
  %s0 = inlined_call_operand.vmem [shape: f32[2,8,64], index: 0, kind: input, shape index: {}]
  %s1 = inlined_call_operand.vmem [shape: f32[8,1], index: 1, kind: input, shape index: {}]
  %s2 = inlined_call_operand.vmem [shape: f32[8,1], index: 2, kind: input, shape index: {}]
  %s3 = inlined_call_operand.vmem [shape: f32[16,8], index: 3, kind: input, shape index: {}]
  %s4 = inlined_call_operand.vmem [shape: f32[16,1], index: 4, kind: input, shape index: {}]
  %s5 = inlined_call_operand.vmem [shape: f32[16,1], index: 5, kind: input, shape index: {}]
  %s6 = inlined_call_operand.vmem [shape: f32[4,144], index: 6, kind: input, shape index: {}]
  %s7 = inlined_call_operand.hbm [shape: f32[9,64,64], index: 7, kind: input, shape index: {}]
  %s8 = inlined_call_operand.vmem [shape: f32[2,4,64], index: 8, kind: output, shape index: {}]
  %s9 = sld [smem:[#allocation0]]
  $region69: #{sparse_stage_forward_pallas.6} parent=0
    _
  %s11 = ssub.s32 1, %s9
  %s12 = scalar_select 0, %s11, %s9
  $region1: #{sparse_stage_forward_pallas.6} parent=0
    #allocation2 [shape = 'u8[294912]{0}', space=vmem, size = 0x48000, scoped, tag = 'input window, operand 7, single buffered']
    #allocation3 [shape = 's32[2]{0}', space=sflag, size = 0x8, scoped, tag = 'scoped memory for sparse_stage_forward_pallas.6']
    %13 = vsyncpa [#allocation3], 0
    loop: start=0, step=1, limit=4
    $region2: #{sparse_stage_forward_pallas.6} parent=1 // loop_pre_header
      _
    $region3: #{sparse_stage_forward_pallas.6} parent=1 // loop_header
      %s15 = sphi 0, %s19
      %p16 = scmp.ge.s32.totalorder %s15, 4
      %s25 = sphi 0, %s27
      %s28 = sphi 0, %s25
      %s29 = sphi 0, %s28
      %s45 = sphi 0, %s29
      %s49 = sphi 0, %s49
      %s51 = sphi 0, %s49
      %s52 = sphi 0, %s51
      %s66 = sphi 0, %s52
      %s70 = sphi 0, %s70
      %s72 = sphi 0, %s70
      %s73 = sphi 0, %s72
      %s87 = sphi 0, %s73
      %s91 = sphi 0, %s91
      %s93 = sphi 0, %s91
      %s94 = sphi 0, %s93
      %s108 = sphi 0, %s94
      %s112 = sphi 0, %s112
      %s114 = sphi 0, %s112
      %s115 = sphi 0, %s114
      %s129 = sphi 0, %s115
      %s133 = sphi 0, %s133
      %s135 = sphi 0, %s133
      %s136 = sphi 0, %s135
      %s150 = sphi 0, %s136
      %s154 = sphi 0, %s154
      %s156 = sphi 0, %s154
      %s157 = sphi 0, %s156
      %s171 = sphi 0, %s157
      %s175 = sphi 0, %s175
      %s177 = sphi 0, %s175
      %s178 = sphi 0, %s177
      %s192 = sphi 0, %s178
      %s198 = sphi 0, %s200
      %s201 = sphi 0, %s198
      %s202 = sphi 0, %s201
      %s218 = sphi 0, %s202
    $region4: #{sparse_stage_forward_pallas.6} parent=1 // loop_header_branch
      %18 = sbr.rel (%p16) target = $region8
    $region5: #{sparse_stage_forward_pallas.6} parent=1 // loop_body
      %s20 = ssub.s32 %s15, 1
      %s21 = ssub.s32 %s15, 2
      %s22 = sadd.s32 %s15, 1
      %s23 = ssub.s32 %s15, %s22
      %p24 = scmp.eq.s32.totalorder %s23, 0
      %s26 = sadd.s32 %s25, 1
      %s27 = scalar_select %p24, %s25, %s26
      %p30 = pneg %p24
      %p31 = scmp.eq.s32.totalorder %s15, 1
      %p32 = por %p30, %p31
      %p33 = scmp.ne.s32.totalorder %s25, %s28
      %p34 = scmp.eq.s32.totalorder %s15, 0
      %p35 = por %p33, %p34
      %p36 = scmp.ne.s32.totalorder %s25, %s28
      %p37 = scmp.eq.s32.totalorder %s20, 1
      %p38 = por %p36, %p37
      %p39 = scmp.ne.s32.totalorder %s28, %s29
      %p40 = scmp.eq.s32.totalorder %s20, 0
      %p41 = por %p39, %p40
      %p42 = scmp.ne.s32.totalorder %s28, %s29
      %p43 = scmp.eq.s32.totalorder %s21, 1
      %p44 = por %p42, %p43
      %p46 = scmp.ne.s32.totalorder %s29, %s45
      %p47 = scmp.eq.s32.totalorder %s21, 0
      %p48 = por %p46, %p47
      %s50 = sadd.s32 %s49, 1
      %p53 = scmp.eq.s32.totalorder %s15, 1
      %p54 = scmp.ne.s32.totalorder %s49, %s51
      %p55 = scmp.eq.s32.totalorder %s15, 0
      %p56 = por %p54, %p55
      %p57 = scmp.ne.s32.totalorder %s49, %s51
      %p58 = scmp.eq.s32.totalorder %s20, 1
      %p59 = por %p57, %p58
      %p60 = scmp.ne.s32.totalorder %s51, %s52
      %p61 = scmp.eq.s32.totalorder %s20, 0
      %p62 = por %p60, %p61
      %p63 = scmp.ne.s32.totalorder %s51, %s52
      %p64 = scmp.eq.s32.totalorder %s21, 1
      %p65 = por %p63, %p64
      %p67 = scmp.ne.s32.totalorder %s52, %s66
      %p68 = scmp.eq.s32.totalorder %s21, 0
      %p69 = por %p67, %p68
      %s71 = sadd.s32 %s70, 1
      %p74 = scmp.eq.s32.totalorder %s15, 1
      %p75 = scmp.ne.s32.totalorder %s70, %s72
      %p76 = scmp.eq.s32.totalorder %s15, 0
      %p77 = por %p75, %p76
      %p78 = scmp.ne.s32.totalorder %s70, %s72
      %p79 = scmp.eq.s32.totalorder %s20, 1
      %p80 = por %p78, %p79
      %p81 = scmp.ne.s32.totalorder %s72, %s73
      %p82 = scmp.eq.s32.totalorder %s20, 0
      %p83 = por %p81, %p82
      %p84 = scmp.ne.s32.totalorder %s72, %s73
      %p85 = scmp.eq.s32.totalorder %s21, 1
      %p86 = por %p84, %p85
      %p88 = scmp.ne.s32.totalorder %s73, %s87
      %p89 = scmp.eq.s32.totalorder %s21, 0
      %p90 = por %p88, %p89
      %s92 = sadd.s32 %s91, 1
      %p95 = scmp.eq.s32.totalorder %s15, 1
      %p96 = scmp.ne.s32.totalorder %s91, %s93
      %p97 = scmp.eq.s32.totalorder %s15, 0
      %p98 = por %p96, %p97
      %p99 = scmp.ne.s32.totalorder %s91, %s93
      %p100 = scmp.eq.s32.totalorder %s20, 1
      %p101 = por %p99, %p100
      %p102 = scmp.ne.s32.totalorder %s93, %s94
      %p103 = scmp.eq.s32.totalorder %s20, 0
      %p104 = por %p102, %p103
      %p105 = scmp.ne.s32.totalorder %s93, %s94
      %p106 = scmp.eq.s32.totalorder %s21, 1
      %p107 = por %p105, %p106
      %p109 = scmp.ne.s32.totalorder %s94, %s108
      %p110 = scmp.eq.s32.totalorder %s21, 0
      %p111 = por %p109, %p110
      %s113 = sadd.s32 %s112, 1
      %p116 = scmp.eq.s32.totalorder %s15, 1
      %p117 = scmp.ne.s32.totalorder %s112, %s114
      %p118 = scmp.eq.s32.totalorder %s15, 0
      %p119 = por %p117, %p118
      %p120 = scmp.ne.s32.totalorder %s112, %s114
      %p121 = scmp.eq.s32.totalorder %s20, 1
      %p122 = por %p120, %p121
      %p123 = scmp.ne.s32.totalorder %s114, %s115
      %p124 = scmp.eq.s32.totalorder %s20, 0
      %p125 = por %p123, %p124
      %p126 = scmp.ne.s32.totalorder %s114, %s115
      %p127 = scmp.eq.s32.totalorder %s21, 1
      %p128 = por %p126, %p127
      %p130 = scmp.ne.s32.totalorder %s115, %s129
      %p131 = scmp.eq.s32.totalorder %s21, 0
      %p132 = por %p130, %p131
      %s134 = sadd.s32 %s133, 1
      %p137 = scmp.eq.s32.totalorder %s15, 1
      %p138 = scmp.ne.s32.totalorder %s133, %s135
      %p139 = scmp.eq.s32.totalorder %s15, 0
      %p140 = por %p138, %p139
      %p141 = scmp.ne.s32.totalorder %s133, %s135
      %p142 = scmp.eq.s32.totalorder %s20, 1
      %p143 = por %p141, %p142
      %p144 = scmp.ne.s32.totalorder %s135, %s136
      %p145 = scmp.eq.s32.totalorder %s20, 0
      %p146 = por %p144, %p145
      %p147 = scmp.ne.s32.totalorder %s135, %s136
      %p148 = scmp.eq.s32.totalorder %s21, 1
      %p149 = por %p147, %p148
      %p151 = scmp.ne.s32.totalorder %s136, %s150
      %p152 = scmp.eq.s32.totalorder %s21, 0
      %p153 = por %p151, %p152
      %s155 = sadd.s32 %s154, 1
      %p158 = scmp.eq.s32.totalorder %s15, 1
      %p159 = scmp.ne.s32.totalorder %s154, %s156
      %p160 = scmp.eq.s32.totalorder %s15, 0
      %p161 = por %p159, %p160
      %p162 = scmp.ne.s32.totalorder %s154, %s156
      %p163 = scmp.eq.s32.totalorder %s20, 1
      %p164 = por %p162, %p163
      %p165 = scmp.ne.s32.totalorder %s156, %s157
      %p166 = scmp.eq.s32.totalorder %s20, 0
      %p167 = por %p165, %p166
      %p168 = scmp.ne.s32.totalorder %s156, %s157
      %p169 = scmp.eq.s32.totalorder %s21, 1
      %p170 = por %p168, %p169
      %p172 = scmp.ne.s32.totalorder %s157, %s171
      %p173 = scmp.eq.s32.totalorder %s21, 0
      %p174 = por %p172, %p173
      %s176 = sadd.s32 %s175, 1
      %p179 = scmp.eq.s32.totalorder %s15, 1
      %p180 = scmp.ne.s32.totalorder %s175, %s177
      %p181 = scmp.eq.s32.totalorder %s15, 0
      %p182 = por %p180, %p181
      %p183 = scmp.ne.s32.totalorder %s175, %s177
      %p184 = scmp.eq.s32.totalorder %s20, 1
      %p185 = por %p183, %p184
      %p186 = scmp.ne.s32.totalorder %s177, %s178
      %p187 = scmp.eq.s32.totalorder %s20, 0
      %p188 = por %p186, %p187
      %p189 = scmp.ne.s32.totalorder %s177, %s178
      %p190 = scmp.eq.s32.totalorder %s21, 1
      %p191 = por %p189, %p190
      %p193 = scmp.ne.s32.totalorder %s178, %s192
      %p194 = scmp.eq.s32.totalorder %s21, 0
      %p195 = por %p193, %p194
      %s196 = ssub.s32 %s15, %s22
      %p197 = scmp.eq.s32.totalorder %s196, 0
      %s199 = sadd.s32 %s198, 1
      %s200 = scalar_select %p197, %s198, %s199
      %p203 = pneg %p197
      %p204 = scmp.eq.s32.totalorder %s15, 1
      %p205 = por %p203, %p204
      %p206 = scmp.ne.s32.totalorder %s198, %s201
      %p207 = scmp.eq.s32.totalorder %s15, 0
      %p208 = por %p206, %p207
      %p209 = scmp.ne.s32.totalorder %s198, %s201
      %p210 = scmp.eq.s32.totalorder %s20, 1
      %p211 = por %p209, %p210
      %p212 = scmp.ne.s32.totalorder %s201, %s202
      %p213 = scmp.eq.s32.totalorder %s20, 0
      %p214 = por %p212, %p213
      %p215 = scmp.ne.s32.totalorder %s201, %s202
      %p216 = scmp.eq.s32.totalorder %s21, 1
      %p217 = por %p215, %p216
      %p219 = scmp.ne.s32.totalorder %s202, %s218
      %p220 = scmp.eq.s32.totalorder %s21, 0
      %p221 = por %p219, %p220
      %p222 = scmp.le.s32.totalorder 1, %s15
      %p223 = scmp.lt.s32.totalorder %s15, 3
      %p224 = pnand %p222, %p223
      %p225 = pneg %p224
      // Predicated region
      $region9: #{sparse_stage_forward_pallas.6} parent=5 // pred_check
        _
      $region10: #{sparse_stage_forward_pallas.6} parent=5 // pred_check_branch
        %227 = sbr.rel (%p224) target = $region12
      $region11: #{sparse_stage_forward_pallas.6} parent=5 // pred_region
        %s228 = ssub.s32 %s15, 1
        // Predicated region
        $region13: #{sparse_stage_forward_pallas.6} parent=11 // pred_check
          %p229 = pneg %p62
        $region14: #{sparse_stage_forward_pallas.6} parent=11 // pred_check_branch
          %231 = sbr.rel (%p229) target = $region16
        $region15: #{sparse_stage_forward_pallas.6} parent=11 // pred_region
          _
        $region16: #{sparse_stage_forward_pallas.6} parent=11 // pred_fallthru
          _
        // Predicated region
        $region17: #{sparse_stage_forward_pallas.6} parent=11 // pred_check
          %p232 = pneg %p83
        $region18: #{sparse_stage_forward_pallas.6} parent=11 // pred_check_branch
          %234 = sbr.rel (%p232) target = $region20
        $region19: #{sparse_stage_forward_pallas.6} parent=11 // pred_region
          _
        $region20: #{sparse_stage_forward_pallas.6} parent=11 // pred_fallthru
          _
        // Predicated region
        $region21: #{sparse_stage_forward_pallas.6} parent=11 // pred_check
          %p235 = pneg %p104
        $region22: #{sparse_stage_forward_pallas.6} parent=11 // pred_check_branch
          %237 = sbr.rel (%p235) target = $region24
        $region23: #{sparse_stage_forward_pallas.6} parent=11 // pred_region
          _
        $region24: #{sparse_stage_forward_pallas.6} parent=11 // pred_fallthru
          _
        // Predicated region
        $region25: #{sparse_stage_forward_pallas.6} parent=11 // pred_check
          %p238 = pneg %p125
        $region26: #{sparse_stage_forward_pallas.6} parent=11 // pred_check_branch
          %240 = sbr.rel (%p238) target = $region28
        $region27: #{sparse_stage_forward_pallas.6} parent=11 // pred_region
          _
        $region28: #{sparse_stage_forward_pallas.6} parent=11 // pred_fallthru
          _
        // Predicated region
        $region29: #{sparse_stage_forward_pallas.6} parent=11 // pred_check
          %p241 = pneg %p146
        $region30: #{sparse_stage_forward_pallas.6} parent=11 // pred_check_branch
          %243 = sbr.rel (%p241) target = $region32
        $region31: #{sparse_stage_forward_pallas.6} parent=11 // pred_region
          _
        $region32: #{sparse_stage_forward_pallas.6} parent=11 // pred_fallthru
          _
        // Predicated region
        $region33: #{sparse_stage_forward_pallas.6} parent=11 // pred_check
          %p244 = pneg %p167
        $region34: #{sparse_stage_forward_pallas.6} parent=11 // pred_check_branch
          %246 = sbr.rel (%p244) target = $region36
        $region35: #{sparse_stage_forward_pallas.6} parent=11 // pred_region
          _
        $region36: #{sparse_stage_forward_pallas.6} parent=11 // pred_fallthru
          _
        // Predicated region
        $region37: #{sparse_stage_forward_pallas.6} parent=11 // pred_check
          %p247 = pneg %p188
        $region38: #{sparse_stage_forward_pallas.6} parent=11 // pred_check_branch
          %249 = sbr.rel (%p247) target = $region40
        $region39: #{sparse_stage_forward_pallas.6} parent=11 // pred_region
          %251 = vsyncadd [#allocation3], 0
          %s252 = sshll.u32 %s7, 4
          %s253 = int_to_ptr.hbm [resolvable:$true] %s252
          %s254 = sshll.u32 [#allocation2], 4
          %s255 = int_to_ptr.vmem [resolvable:$true] %s254
          %260 = dma.hbm_to_vmem [thread:$0]  %s253, 9216, %s255, [#allocation3], 128, 128, 8
        $region40: #{sparse_stage_forward_pallas.6} parent=11 // pred_fallthru
          _
      $region12: #{sparse_stage_forward_pallas.6} parent=5 // pred_fallthru
        _
      %p261 = scmp.lt.s32.totalorder %s15, 2
      // Predicated region
      $region41: #{sparse_stage_forward_pallas.6} parent=5 // pred_check
        %p262 = pneg %p261
      $region42: #{sparse_stage_forward_pallas.6} parent=5 // pred_check_branch
        %264 = sbr.rel (%p262) target = $region44
      $region43: #{sparse_stage_forward_pallas.6} parent=5 // pred_region
        // Predicated region
        $region45: #{sparse_stage_forward_pallas.6} parent=43 // pred_check
          %p265 = pneg %p35
        $region46: #{sparse_stage_forward_pallas.6} parent=43 // pred_check_branch
          %267 = sbr.rel (%p265) target = $region48
        $region47: #{sparse_stage_forward_pallas.6} parent=43 // pred_region
          %p268 = scmp.lt.s32.totalorder %s15, 1
          %s269 = scalar_select %p268, %s15, 1
          %s270 = smul.addr %s269, 8
          %s271 = scalar_lea.vmem %s0, %s270
        $region48: #{sparse_stage_forward_pallas.6} parent=43 // pred_fallthru
          _
      $region44: #{sparse_stage_forward_pallas.6} parent=5 // pred_fallthru
        _
      %p272 = scmp.le.s32.totalorder 1, %s15
      %p273 = scmp.lt.s32.totalorder %s15, 3
      %p274 = pnand %p272, %p273
      %p275 = pneg %p274
      // Predicated region
      $region49: #{sparse_stage_forward_pallas.6} parent=5 // pred_check
        _
      $region50: #{sparse_stage_forward_pallas.6} parent=5 // pred_check_branch
        %277 = sbr.rel (%p274) target = $region52
      $region51: #{sparse_stage_forward_pallas.6} parent=5 // pred_region
        %s278 = ssub.s32 %s15, 1
        // Predicated region
        $region53: #{sparse_stage_forward_pallas.6} parent=51 // pred_check
          %p279 = pneg %p188
        $region54: #{sparse_stage_forward_pallas.6} parent=51 // pred_check_branch
          %281 = sbr.rel (%p279) target = $region56
        $region55: #{sparse_stage_forward_pallas.6} parent=51 // pred_region
          %283 = dma.done [#allocation3], 9216
        $region56: #{sparse_stage_forward_pallas.6} parent=51 // pred_fallthru
          _
        %p284 = scmp.lt.s32.totalorder %s20, 1
        %s285 = scalar_select %p284, %s20, 1
        %s286 = smul.addr %s285, 8
        %s287 = scalar_lea.vmem %s0, %s286
        %p288 = pneg %p41
        %p289 = pneg %p38
        %p290 = pneg %p62
        %p291 = pneg %p59
        %p292 = pneg %p83
        %p293 = pneg %p80
        %p294 = pneg %p104
        %p295 = pneg %p101
        %p296 = pneg %p125
        %p297 = pneg %p122
        %p298 = pneg %p146
        %p299 = pneg %p143
        %p300 = pneg %p167
        %p301 = pneg %p164
        %p302 = pneg %p188
        %p303 = pneg %p185
        %p304 = pneg %p214
        %p305 = pneg %p211
        %p306 = scmp.lt.s32.totalorder %s20, 1
        %s307 = scalar_select %p306, %s20, 1
        %s308 = smul.addr %s307, 4
        %s309 = scalar_lea.vmem %s8, %s308
        %p310 = scmp.lt.s32.totalorder %s20, 1
        %s311 = scalar_select %p310, %s20, 1
        %s312 = smul.addr %s311, 8
        %s313 = scalar_lea.vmem %s0, %s312
        %p314 = scmp.lt.s32.totalorder %s20, 1
        %s315 = scalar_select %p314, %s20, 1
        %s316 = smul.addr %s315, 4
        %s317 = scalar_lea.vmem %s8, %s316
        %v318 = vld [vmem:[%s313] sm:$0xff]
        %v319 = vld [vmem:[%s1] sm:$0xff]
        %321 = vset.pattern.permute.xlu0 0
        %322 = vperm.xlu0 %321, %v319
        %v323 = vpop.permute.xlu0 %322
        %v325 = vmul.f32 %v318, %v323
        %v326 = vld [vmem:[%s2] sm:$0xff]
        %328 = vset.pattern.permute.xlu0 0
        %329 = vperm.xlu0 %328, %v326
        %v330 = vpop.permute.xlu0 %329
        %v332 = vadd.f32 %v325, %v330
        %v333 = vmax.f32 %v332, 0.0
        %v334 = vld [vmem:[%s3] sm:$0xff]
        %v335 = vld [vmem:[%s3 + $0x8] sm:$0xff]
        %vm336 = vcmask 64512
        %v338 = vsel %vm336, %v334, 0
        %v341 = vsel %vm336, %v335, 0
        %343 = vmatpush.msra.mxu0 0.0
        %344 = vmatpush.msra.mxu0 0.0
        %345 = vmatpush.msra.mxu0 0.0
        %346 = vmatpush.msra.mxu0 0.0
        %347 = vmatpush.msra.mxu0 0.0
        %348 = vmatpush.msra.mxu0 0.0
        %349 = vmatpush.msra.mxu0 0.0
        %350 = vmatpush.msra.mxu0 0.0
        %351 = vmatpush.msra.mxu0 0.0
        %352 = vmatpush.msra.mxu0 0.0
        %353 = vmatpush.msra.mxu0 0.0
        %354 = vmatpush.msra.mxu0 0.0
        %355 = vmatpush.msra.mxu0 0.0
        %356 = vmatpush.msra.mxu0 0.0
        %357 = vmatpush.msra.mxu0 0.0
        %358 = vmatpush.msra.mxu0 %v333
        %359 = vmatmul.f32.gmra.mxu0 %v338
        %v360 = vpop.f32.mrf.mxu0
        %v361 = vadd.f32 0.0, %v360
        %362 = vmatmul.f32.gmra.mxu0 %v341
        %v363 = vpop.f32.mrf.mxu0
        %v364 = vadd.f32 0.0, %v363
        %365 = vdwg.mxu0
        %v366 = vld [vmem:[%s4] sm:$0xff]
        %v367 = vld [vmem:[%s4 + $0x8] sm:$0xff]
        %369 = vset.pattern.permute.xlu0 0
        %370 = vperm.xlu0 %369, %v366
        %v371 = vpop.permute.xlu0 %370
        %374 = vset.pattern.permute.xlu0 0
        %375 = vperm.xlu0 %374, %v367
        %v376 = vpop.permute.xlu0 %375
        %v378 = vmul.f32 %v361, %v371
        %v379 = vmul.f32 %v364, %v376
        %v380 = vld [vmem:[%s5] sm:$0xff]
        %v381 = vld [vmem:[%s5 + $0x8] sm:$0xff]
        %383 = vset.pattern.permute.xlu0 0
        %384 = vperm.xlu0 %383, %v380
        %v385 = vpop.permute.xlu0 %384
        %388 = vset.pattern.permute.xlu0 0
        %389 = vperm.xlu0 %388, %v381
        %v390 = vpop.permute.xlu0 %389
        %v392 = vadd.f32 %v378, %v385
        %v393 = vadd.f32 %v379, %v390
        %v394 = vmax.f32 %v392, 0.0
        %v395 = vmax.f32 %v393, 0.0
        %v396 = vld [vmem:[#allocation2] sm:$0xff]
        %v397 = vld [vmem:[#allocation2 + $0x8] sm:$0xff]
        %v398 = vld [vmem:[#allocation2 + $0x10] sm:$0xff]
        %v399 = vld [vmem:[#allocation2 + $0x18] sm:$0xff]
        %v400 = vld [vmem:[#allocation2 + $0x20] sm:$0xff]
        %v401 = vld [vmem:[#allocation2 + $0x28] sm:$0xff]
        %v402 = vld [vmem:[#allocation2 + $0x30] sm:$0xff]
        %v403 = vld [vmem:[#allocation2 + $0x38] sm:$0xff]
        %vm404 = vcmask 523264
        %v406 = vsel %vm404, %v394, 0
        %v409 = vsel %vm404, %v395, 0
        %411 = vmatpush.msra.mxu0 0.0
        %412 = vmatpush.msra.mxu0 0.0
        %413 = vmatpush.msra.mxu0 0.0
        %414 = vmatpush.msra.mxu0 0.0
        %415 = vmatpush.msra.mxu0 0.0
        %416 = vmatpush.msra.mxu0 0.0
        %417 = vmatpush.msra.mxu0 0.0
        %418 = vmatpush.msra.mxu0 0.0
        %419 = vmatpush.msra.mxu0 %v403
        %420 = vmatpush.msra.mxu0 %v402
        %421 = vmatpush.msra.mxu0 %v401
        %422 = vmatpush.msra.mxu0 %v400
        %423 = vmatpush.msra.mxu0 %v399
        %424 = vmatpush.msra.mxu0 %v398
        %425 = vmatpush.msra.mxu0 %v397
        %426 = vmatpush.msra.mxu0 %v396
        %427 = vmatmul.f32.gmra.mxu0 %v406
        %v428 = vpop.f32.mrf.mxu0
        %v429 = vadd.f32 0.0, %v428
        %430 = vmatmul.f32.gmra.mxu0 %v409
        %v431 = vpop.f32.mrf.mxu0
        %v432 = vadd.f32 0.0, %v431
        %433 = vdwg.mxu0
        %s434 = scalar_lea.vmem [#allocation2], 64
        %v435 = vld [vmem:[%s434] sm:$0xff]
        %v436 = vld [vmem:[%s434 + $0x8] sm:$0xff]
        %v437 = vld [vmem:[%s434 + $0x10] sm:$0xff]
        %v438 = vld [vmem:[%s434 + $0x18] sm:$0xff]
        %v439 = vld [vmem:[%s434 + $0x20] sm:$0xff]
        %v440 = vld [vmem:[%s434 + $0x28] sm:$0xff]
        %v441 = vld [vmem:[%s434 + $0x30] sm:$0xff]
        %v442 = vld [vmem:[%s434 + $0x38] sm:$0xff]
        %443 = vmatpush.msra.mxu0 0.0
        %444 = vmatpush.msra.mxu0 0.0
        %445 = vmatpush.msra.mxu0 0.0
        %446 = vmatpush.msra.mxu0 0.0
        %447 = vmatpush.msra.mxu0 0.0
        %448 = vmatpush.msra.mxu0 0.0
        %449 = vmatpush.msra.mxu0 0.0
        %450 = vmatpush.msra.mxu0 0.0
        %451 = vmatpush.msra.mxu0 %v442
        %452 = vmatpush.msra.mxu0 %v441
        %453 = vmatpush.msra.mxu0 %v440
        %454 = vmatpush.msra.mxu0 %v439
        %455 = vmatpush.msra.mxu0 %v438
        %456 = vmatpush.msra.mxu0 %v437
        %457 = vmatpush.msra.mxu0 %v436
        %458 = vmatpush.msra.mxu0 %v435
        %459 = vmatmul.f32.gmra.mxu0 %v406
        %v460 = vpop.f32.mrf.mxu0
        %v461 = vadd.f32 0.0, %v460
        %462 = vmatmul.f32.gmra.mxu0 %v409
        %v463 = vpop.f32.mrf.mxu0
        %v464 = vadd.f32 0.0, %v463
        %465 = vdwg.mxu0
        %s466 = scalar_lea.vmem [#allocation2], 128
        %v467 = vld [vmem:[%s466] sm:$0xff]
        %v468 = vld [vmem:[%s466 + $0x8] sm:$0xff]
        %v469 = vld [vmem:[%s466 + $0x10] sm:$0xff]
        %v470 = vld [vmem:[%s466 + $0x18] sm:$0xff]
        %v471 = vld [vmem:[%s466 + $0x20] sm:$0xff]
        %v472 = vld [vmem:[%s466 + $0x28] sm:$0xff]
        %v473 = vld [vmem:[%s466 + $0x30] sm:$0xff]
        %v474 = vld [vmem:[%s466 + $0x38] sm:$0xff]
        %475 = vmatpush.msra.mxu0 0.0
        %476 = vmatpush.msra.mxu0 0.0
        %477 = vmatpush.msra.mxu0 0.0
        %478 = vmatpush.msra.mxu0 0.0
        %479 = vmatpush.msra.mxu0 0.0
        %480 = vmatpush.msra.mxu0 0.0
        %481 = vmatpush.msra.mxu0 0.0
        %482 = vmatpush.msra.mxu0 0.0
        %483 = vmatpush.msra.mxu0 %v474
        %484 = vmatpush.msra.mxu0 %v473
        %485 = vmatpush.msra.mxu0 %v472
        %486 = vmatpush.msra.mxu0 %v471
        %487 = vmatpush.msra.mxu0 %v470
        %488 = vmatpush.msra.mxu0 %v469
        %489 = vmatpush.msra.mxu0 %v468
        %490 = vmatpush.msra.mxu0 %v467
        %491 = vmatmul.f32.gmra.mxu0 %v406
        %v492 = vpop.f32.mrf.mxu0
        %v493 = vadd.f32 0.0, %v492
        %494 = vmatmul.f32.gmra.mxu0 %v409
        %v495 = vpop.f32.mrf.mxu0
        %v496 = vadd.f32 0.0, %v495
        %497 = vdwg.mxu0
        %s498 = scalar_lea.vmem [#allocation2], 192
        %v499 = vld [vmem:[%s498] sm:$0xff]
        %v500 = vld [vmem:[%s498 + $0x8] sm:$0xff]
        %v501 = vld [vmem:[%s498 + $0x10] sm:$0xff]
        %v502 = vld [vmem:[%s498 + $0x18] sm:$0xff]
        %v503 = vld [vmem:[%s498 + $0x20] sm:$0xff]
        %v504 = vld [vmem:[%s498 + $0x28] sm:$0xff]
        %v505 = vld [vmem:[%s498 + $0x30] sm:$0xff]
        %v506 = vld [vmem:[%s498 + $0x38] sm:$0xff]
        %507 = vmatpush.msra.mxu0 0.0
        %508 = vmatpush.msra.mxu0 0.0
        %509 = vmatpush.msra.mxu0 0.0
        %510 = vmatpush.msra.mxu0 0.0
        %511 = vmatpush.msra.mxu0 0.0
        %512 = vmatpush.msra.mxu0 0.0
        %513 = vmatpush.msra.mxu0 0.0
        %514 = vmatpush.msra.mxu0 0.0
        %515 = vmatpush.msra.mxu0 %v506
        %516 = vmatpush.msra.mxu0 %v505
        %517 = vmatpush.msra.mxu0 %v504
        %518 = vmatpush.msra.mxu0 %v503
        %519 = vmatpush.msra.mxu0 %v502
        %520 = vmatpush.msra.mxu0 %v501
        %521 = vmatpush.msra.mxu0 %v500
        %522 = vmatpush.msra.mxu0 %v499
        %523 = vmatmul.f32.gmra.mxu0 %v406
        %v524 = vpop.f32.mrf.mxu0
        %v525 = vadd.f32 0.0, %v524
        %526 = vmatmul.f32.gmra.mxu0 %v409
        %v527 = vpop.f32.mrf.mxu0
        %v528 = vadd.f32 0.0, %v527
        %529 = vdwg.mxu0
        %s530 = scalar_lea.vmem [#allocation2], 256
        %v531 = vld [vmem:[%s530] sm:$0xff]
        %v532 = vld [vmem:[%s530 + $0x8] sm:$0xff]
        %v533 = vld [vmem:[%s530 + $0x10] sm:$0xff]
        %v534 = vld [vmem:[%s530 + $0x18] sm:$0xff]
        %v535 = vld [vmem:[%s530 + $0x20] sm:$0xff]
        %v536 = vld [vmem:[%s530 + $0x28] sm:$0xff]
        %v537 = vld [vmem:[%s530 + $0x30] sm:$0xff]
        %v538 = vld [vmem:[%s530 + $0x38] sm:$0xff]
        %539 = vmatpush.msra.mxu0 0.0
        %540 = vmatpush.msra.mxu0 0.0
        %541 = vmatpush.msra.mxu0 0.0
        %542 = vmatpush.msra.mxu0 0.0
        %543 = vmatpush.msra.mxu0 0.0
        %544 = vmatpush.msra.mxu0 0.0
        %545 = vmatpush.msra.mxu0 0.0
        %546 = vmatpush.msra.mxu0 0.0
        %547 = vmatpush.msra.mxu0 %v538
        %548 = vmatpush.msra.mxu0 %v537
        %549 = vmatpush.msra.mxu0 %v536
        %550 = vmatpush.msra.mxu0 %v535
        %551 = vmatpush.msra.mxu0 %v534
        %552 = vmatpush.msra.mxu0 %v533
        %553 = vmatpush.msra.mxu0 %v532
        %554 = vmatpush.msra.mxu0 %v531
        %555 = vmatmul.f32.gmra.mxu0 %v406
        %v556 = vpop.f32.mrf.mxu0
        %v557 = vadd.f32 0.0, %v556
        %558 = vmatmul.f32.gmra.mxu0 %v409
        %v559 = vpop.f32.mrf.mxu0
        %v560 = vadd.f32 0.0, %v559
        %561 = vdwg.mxu0
        %s562 = scalar_lea.vmem [#allocation2], 320
        %v563 = vld [vmem:[%s562] sm:$0xff]
        %v564 = vld [vmem:[%s562 + $0x8] sm:$0xff]
        %v565 = vld [vmem:[%s562 + $0x10] sm:$0xff]
        %v566 = vld [vmem:[%s562 + $0x18] sm:$0xff]
        %v567 = vld [vmem:[%s562 + $0x20] sm:$0xff]
        %v568 = vld [vmem:[%s562 + $0x28] sm:$0xff]
        %v569 = vld [vmem:[%s562 + $0x30] sm:$0xff]
        %v570 = vld [vmem:[%s562 + $0x38] sm:$0xff]
        %571 = vmatpush.msra.mxu0 0.0
        %572 = vmatpush.msra.mxu0 0.0
        %573 = vmatpush.msra.mxu0 0.0
        %574 = vmatpush.msra.mxu0 0.0
        %575 = vmatpush.msra.mxu0 0.0
        %576 = vmatpush.msra.mxu0 0.0
        %577 = vmatpush.msra.mxu0 0.0
        %578 = vmatpush.msra.mxu0 0.0
        %579 = vmatpush.msra.mxu0 %v570
        %580 = vmatpush.msra.mxu0 %v569
        %581 = vmatpush.msra.mxu0 %v568
        %582 = vmatpush.msra.mxu0 %v567
        %583 = vmatpush.msra.mxu0 %v566
        %584 = vmatpush.msra.mxu0 %v565
        %585 = vmatpush.msra.mxu0 %v564
        %586 = vmatpush.msra.mxu0 %v563
        %587 = vmatmul.f32.gmra.mxu0 %v406
        %v588 = vpop.f32.mrf.mxu0
        %v589 = vadd.f32 0.0, %v588
        %590 = vmatmul.f32.gmra.mxu0 %v409
        %v591 = vpop.f32.mrf.mxu0
        %v592 = vadd.f32 0.0, %v591
        %593 = vdwg.mxu0
        %s594 = scalar_lea.vmem [#allocation2], 384
        %v595 = vld [vmem:[%s594] sm:$0xff]
        %v596 = vld [vmem:[%s594 + $0x8] sm:$0xff]
        %v597 = vld [vmem:[%s594 + $0x10] sm:$0xff]
        %v598 = vld [vmem:[%s594 + $0x18] sm:$0xff]
        %v599 = vld [vmem:[%s594 + $0x20] sm:$0xff]
        %v600 = vld [vmem:[%s594 + $0x28] sm:$0xff]
        %v601 = vld [vmem:[%s594 + $0x30] sm:$0xff]
        %v602 = vld [vmem:[%s594 + $0x38] sm:$0xff]
        %603 = vmatpush.msra.mxu0 0.0
        %604 = vmatpush.msra.mxu0 0.0
        %605 = vmatpush.msra.mxu0 0.0
        %606 = vmatpush.msra.mxu0 0.0
        %607 = vmatpush.msra.mxu0 0.0
        %608 = vmatpush.msra.mxu0 0.0
        %609 = vmatpush.msra.mxu0 0.0
        %610 = vmatpush.msra.mxu0 0.0
        %611 = vmatpush.msra.mxu0 %v602
        %612 = vmatpush.msra.mxu0 %v601
        %613 = vmatpush.msra.mxu0 %v600
        %614 = vmatpush.msra.mxu0 %v599
        %615 = vmatpush.msra.mxu0 %v598
        %616 = vmatpush.msra.mxu0 %v597
        %617 = vmatpush.msra.mxu0 %v596
        %618 = vmatpush.msra.mxu0 %v595
        %619 = vmatmul.f32.gmra.mxu0 %v406
        %v620 = vpop.f32.mrf.mxu0
        %v621 = vadd.f32 0.0, %v620
        %622 = vmatmul.f32.gmra.mxu0 %v409
        %v623 = vpop.f32.mrf.mxu0
        %v624 = vadd.f32 0.0, %v623
        %625 = vdwg.mxu0
        %s626 = scalar_lea.vmem [#allocation2], 448
        %v627 = vld [vmem:[%s626] sm:$0xff]
        %v628 = vld [vmem:[%s626 + $0x8] sm:$0xff]
        %v629 = vld [vmem:[%s626 + $0x10] sm:$0xff]
        %v630 = vld [vmem:[%s626 + $0x18] sm:$0xff]
        %v631 = vld [vmem:[%s626 + $0x20] sm:$0xff]
        %v632 = vld [vmem:[%s626 + $0x28] sm:$0xff]
        %v633 = vld [vmem:[%s626 + $0x30] sm:$0xff]
        %v634 = vld [vmem:[%s626 + $0x38] sm:$0xff]
        %635 = vmatpush.msra.mxu0 0.0
        %636 = vmatpush.msra.mxu0 0.0
        %637 = vmatpush.msra.mxu0 0.0
        %638 = vmatpush.msra.mxu0 0.0
        %639 = vmatpush.msra.mxu0 0.0
        %640 = vmatpush.msra.mxu0 0.0
        %641 = vmatpush.msra.mxu0 0.0
        %642 = vmatpush.msra.mxu0 0.0
        %643 = vmatpush.msra.mxu0 %v634
        %644 = vmatpush.msra.mxu0 %v633
        %645 = vmatpush.msra.mxu0 %v632
        %646 = vmatpush.msra.mxu0 %v631
        %647 = vmatpush.msra.mxu0 %v630
        %648 = vmatpush.msra.mxu0 %v629
        %649 = vmatpush.msra.mxu0 %v628
        %650 = vmatpush.msra.mxu0 %v627
        %651 = vmatmul.f32.gmra.mxu0 %v406
        %v652 = vpop.f32.mrf.mxu0
        %v653 = vadd.f32 0.0, %v652
        %654 = vmatmul.f32.gmra.mxu0 %v409
        %v655 = vpop.f32.mrf.mxu0
        %v656 = vadd.f32 0.0, %v655
        %657 = vdwg.mxu0
        %s658 = scalar_lea.vmem [#allocation2], 512
        %v659 = vld [vmem:[%s658] sm:$0xff]
        %v660 = vld [vmem:[%s658 + $0x8] sm:$0xff]
        %v661 = vld [vmem:[%s658 + $0x10] sm:$0xff]
        %v662 = vld [vmem:[%s658 + $0x18] sm:$0xff]
        %v663 = vld [vmem:[%s658 + $0x20] sm:$0xff]
        %v664 = vld [vmem:[%s658 + $0x28] sm:$0xff]
        %v665 = vld [vmem:[%s658 + $0x30] sm:$0xff]
        %v666 = vld [vmem:[%s658 + $0x38] sm:$0xff]
        %667 = vmatpush.msra.mxu0 0.0
        %668 = vmatpush.msra.mxu0 0.0
        %669 = vmatpush.msra.mxu0 0.0
        %670 = vmatpush.msra.mxu0 0.0
        %671 = vmatpush.msra.mxu0 0.0
        %672 = vmatpush.msra.mxu0 0.0
        %673 = vmatpush.msra.mxu0 0.0
        %674 = vmatpush.msra.mxu0 0.0
        %675 = vmatpush.msra.mxu0 %v666
        %676 = vmatpush.msra.mxu0 %v665
        %677 = vmatpush.msra.mxu0 %v664
        %678 = vmatpush.msra.mxu0 %v663
        %679 = vmatpush.msra.mxu0 %v662
        %680 = vmatpush.msra.mxu0 %v661
        %681 = vmatpush.msra.mxu0 %v660
        %682 = vmatpush.msra.mxu0 %v659
        %683 = vmatmul.f32.gmra.mxu0 %v406
        %v684 = vpop.f32.mrf.mxu0
        %v685 = vadd.f32 0.0, %v684
        %686 = vmatmul.f32.gmra.mxu0 %v409
        %v687 = vpop.f32.mrf.mxu0
        %v688 = vadd.f32 0.0, %v687
        %689 = vdwg.mxu0
        %v690 = vld [vmem:[%s6] sm:$0xff]
        %692 = vst [vmem:[#allocation1] ss:$2 sm:$0xff] %v690
        %v693 = vld.sshfl [vmem:[#allocation1] sm:$0xff pattern:$0x75316420]
        %v694 = vld.sshfl [vmem:[#allocation1 + $0x8] sm:$0xff pattern:$0x75316420]
        %vm696 = vcmask 130048
        %v697 = vsel %vm696, %v694, 0
        %699 = vmatpush.msra.mxu0 %v656
        %700 = vmatpush.msra.mxu0 %v653
        %701 = vmatpush.msra.mxu0 %v624
        %702 = vmatpush.msra.mxu0 %v621
        %703 = vmatpush.msra.mxu0 %v592
        %704 = vmatpush.msra.mxu0 %v589
        %705 = vmatpush.msra.mxu0 %v560
        %706 = vmatpush.msra.mxu0 %v557
        %707 = vmatpush.msra.mxu0 %v528
        %708 = vmatpush.msra.mxu0 %v525
        %709 = vmatpush.msra.mxu0 %v496
        %710 = vmatpush.msra.mxu0 %v493
        %711 = vmatpush.msra.mxu0 %v464
        %712 = vmatpush.msra.mxu0 %v461
        %713 = vmatpush.msra.mxu0 %v432
        %714 = vmatpush.msra.mxu0 %v429
        %715 = vmatmul.f32.gmra.mxu0 %v693
        %v716 = vpop.f32.mrf.mxu0
        %v717 = vadd.f32 0.0, %v716
        %718 = vdwg.mxu0
        %719 = vmatpush.msra.mxu0 0.0
        %720 = vmatpush.msra.mxu0 0.0
        %721 = vmatpush.msra.mxu0 0.0
        %722 = vmatpush.msra.mxu0 0.0
        %723 = vmatpush.msra.mxu0 0.0
        %724 = vmatpush.msra.mxu0 0.0
        %725 = vmatpush.msra.mxu0 0.0
        %726 = vmatpush.msra.mxu0 0.0
        %727 = vmatpush.msra.mxu0 0.0
        %728 = vmatpush.msra.mxu0 0.0
        %729 = vmatpush.msra.mxu0 0.0
        %730 = vmatpush.msra.mxu0 0.0
        %731 = vmatpush.msra.mxu0 0.0
        %732 = vmatpush.msra.mxu0 0.0
        %733 = vmatpush.msra.mxu0 %v688
        %734 = vmatpush.msra.mxu0 %v685
        %735 = vmatmul.f32.gmra.mxu0 %v697
        %v736 = vpop.f32.mrf.mxu0
        %v737 = vadd.f32 %v717, %v736
        %738 = vdwg.mxu0
        %vm739 = vcmask 519168
        %740 = vst.msk [vmem:[%s317] sm:$0xf] %vm739, %v737
        %p741 = scmp.lt.s32.totalorder %s20, 1
        %s742 = scalar_select %p741, %s20, 1
        %s743 = smul.addr %s742, 4
        %s744 = scalar_lea.vmem %s8, %s743
        // Predicated region
        $region57: #{sparse_stage_forward_pallas.6} parent=51 // pred_check
          %p745 = pneg %p211
        $region58: #{sparse_stage_forward_pallas.6} parent=51 // pred_check_branch
          %747 = sbr.rel (%p745) target = $region60
        $region59: #{sparse_stage_forward_pallas.6} parent=51 // pred_region
          _
        $region60: #{sparse_stage_forward_pallas.6} parent=51 // pred_fallthru
          _
      $region52: #{sparse_stage_forward_pallas.6} parent=5 // pred_fallthru
        _
      %p748 = scmp.le.s32.totalorder 2, %s15
      // Predicated region
      $region61: #{sparse_stage_forward_pallas.6} parent=5 // pred_check
        %p749 = pneg %p748
      $region62: #{sparse_stage_forward_pallas.6} parent=5 // pred_check_branch
        %751 = sbr.rel (%p749) target = $region64
      $region63: #{sparse_stage_forward_pallas.6} parent=5 // pred_region
        %s752 = ssub.s32 %s15, 2
        // Predicated region
        $region65: #{sparse_stage_forward_pallas.6} parent=63 // pred_check
          %p753 = pneg %p217
        $region66: #{sparse_stage_forward_pallas.6} parent=63 // pred_check_branch
          %755 = sbr.rel (%p753) target = $region68
        $region67: #{sparse_stage_forward_pallas.6} parent=63 // pred_region
          %p756 = scmp.lt.s32.totalorder %s21, 1
          %s757 = scalar_select %p756, %s21, 1
          %s758 = smul.addr %s757, 4
          %s759 = scalar_lea.vmem %s8, %s758
        $region68: #{sparse_stage_forward_pallas.6} parent=63 // pred_fallthru
          _
      $region64: #{sparse_stage_forward_pallas.6} parent=5 // pred_fallthru
        _
    $region6: #{sparse_stage_forward_pallas.6} parent=1 // loop_footer
      %s19 = sadd.s32 1, %s15
    $region7: #{sparse_stage_forward_pallas.6} parent=1 // loop_footer_branch
      %14 = sbr.rel target = $region3
    $region8: #{sparse_stage_forward_pallas.6} parent=1 // loop_exit
      _
    %760 = vsyncpa [#allocation3], 1
    %s761 = scalar_lea.sflag [#allocation3], 1
    %762 = vsyncpa %s761, 1

// kernel: sparse_stage_forward_pallas.5
$region0: #{sparse_stage_forward_pallas.5}
  #allocation0 [shape = 'u32[]', space=smem, size = 0x4, offset = 0x4, fixed_abs, tag = 'smem constant byte address 0x4 - core index']
  #allocation1 [shape = 'u32[72,128]{1,0:T(1,128)}', space=vmem, size = 0x9000, scoped, tag = 'internal scratch']
  %s0 = inlined_call_operand.vmem [shape: f32[2,4,64], index: 0, kind: input, shape index: {}]
  %s1 = inlined_call_operand.vmem [shape: f32[4,1], index: 1, kind: input, shape index: {}]
  %s2 = inlined_call_operand.vmem [shape: f32[4,1], index: 2, kind: input, shape index: {}]
  %s3 = inlined_call_operand.vmem [shape: f32[16,4], index: 3, kind: input, shape index: {}]
  %s4 = inlined_call_operand.vmem [shape: f32[16,1], index: 4, kind: input, shape index: {}]
  %s5 = inlined_call_operand.vmem [shape: f32[16,1], index: 5, kind: input, shape index: {}]
  %s6 = inlined_call_operand.vmem [shape: f32[4,144], index: 6, kind: input, shape index: {}]
  %s7 = inlined_call_operand.hbm [shape: f32[9,64,64], index: 7, kind: input, shape index: {}]
  %s8 = inlined_call_operand.vmem [shape: f32[2,4,64], index: 8, kind: output, shape index: {}]
  %s9 = sld [smem:[#allocation0]]
  $region69: #{sparse_stage_forward_pallas.5} parent=0
    _
  %s11 = ssub.s32 1, %s9
  %s12 = scalar_select 0, %s11, %s9
  $region1: #{sparse_stage_forward_pallas.5} parent=0
    #allocation2 [shape = 'u8[294912]{0}', space=vmem, size = 0x48000, scoped, tag = 'input window, operand 7, single buffered']
    #allocation3 [shape = 's32[2]{0}', space=sflag, size = 0x8, scoped, tag = 'scoped memory for sparse_stage_forward_pallas.5']
    %13 = vsyncpa [#allocation3], 0
    loop: start=0, step=1, limit=4
    $region2: #{sparse_stage_forward_pallas.5} parent=1 // loop_pre_header
      _
    $region3: #{sparse_stage_forward_pallas.5} parent=1 // loop_header
      %s15 = sphi 0, %s19
      %p16 = scmp.ge.s32.totalorder %s15, 4
      %s25 = sphi 0, %s27
      %s28 = sphi 0, %s25
      %s29 = sphi 0, %s28
      %s45 = sphi 0, %s29
      %s49 = sphi 0, %s49
      %s51 = sphi 0, %s49
      %s52 = sphi 0, %s51
      %s66 = sphi 0, %s52
      %s70 = sphi 0, %s70
      %s72 = sphi 0, %s70
      %s73 = sphi 0, %s72
      %s87 = sphi 0, %s73
      %s91 = sphi 0, %s91
      %s93 = sphi 0, %s91
      %s94 = sphi 0, %s93
      %s108 = sphi 0, %s94
      %s112 = sphi 0, %s112
      %s114 = sphi 0, %s112
      %s115 = sphi 0, %s114
      %s129 = sphi 0, %s115
      %s133 = sphi 0, %s133
      %s135 = sphi 0, %s133
      %s136 = sphi 0, %s135
      %s150 = sphi 0, %s136
      %s154 = sphi 0, %s154
      %s156 = sphi 0, %s154
      %s157 = sphi 0, %s156
      %s171 = sphi 0, %s157
      %s175 = sphi 0, %s175
      %s177 = sphi 0, %s175
      %s178 = sphi 0, %s177
      %s192 = sphi 0, %s178
      %s198 = sphi 0, %s200
      %s201 = sphi 0, %s198
      %s202 = sphi 0, %s201
      %s218 = sphi 0, %s202
    $region4: #{sparse_stage_forward_pallas.5} parent=1 // loop_header_branch
      %18 = sbr.rel (%p16) target = $region8
    $region5: #{sparse_stage_forward_pallas.5} parent=1 // loop_body
      %s20 = ssub.s32 %s15, 1
      %s21 = ssub.s32 %s15, 2
      %s22 = sadd.s32 %s15, 1
      %s23 = ssub.s32 %s15, %s22
      %p24 = scmp.eq.s32.totalorder %s23, 0
      %s26 = sadd.s32 %s25, 1
      %s27 = scalar_select %p24, %s25, %s26
      %p30 = pneg %p24
      %p31 = scmp.eq.s32.totalorder %s15, 1
      %p32 = por %p30, %p31
      %p33 = scmp.ne.s32.totalorder %s25, %s28
      %p34 = scmp.eq.s32.totalorder %s15, 0
      %p35 = por %p33, %p34
      %p36 = scmp.ne.s32.totalorder %s25, %s28
      %p37 = scmp.eq.s32.totalorder %s20, 1
      %p38 = por %p36, %p37
      %p39 = scmp.ne.s32.totalorder %s28, %s29
      %p40 = scmp.eq.s32.totalorder %s20, 0
      %p41 = por %p39, %p40
      %p42 = scmp.ne.s32.totalorder %s28, %s29
      %p43 = scmp.eq.s32.totalorder %s21, 1
      %p44 = por %p42, %p43
      %p46 = scmp.ne.s32.totalorder %s29, %s45
      %p47 = scmp.eq.s32.totalorder %s21, 0
      %p48 = por %p46, %p47
      %s50 = sadd.s32 %s49, 1
      %p53 = scmp.eq.s32.totalorder %s15, 1
      %p54 = scmp.ne.s32.totalorder %s49, %s51
      %p55 = scmp.eq.s32.totalorder %s15, 0
      %p56 = por %p54, %p55
      %p57 = scmp.ne.s32.totalorder %s49, %s51
      %p58 = scmp.eq.s32.totalorder %s20, 1
      %p59 = por %p57, %p58
      %p60 = scmp.ne.s32.totalorder %s51, %s52
      %p61 = scmp.eq.s32.totalorder %s20, 0
      %p62 = por %p60, %p61
      %p63 = scmp.ne.s32.totalorder %s51, %s52
      %p64 = scmp.eq.s32.totalorder %s21, 1
      %p65 = por %p63, %p64
      %p67 = scmp.ne.s32.totalorder %s52, %s66
      %p68 = scmp.eq.s32.totalorder %s21, 0
      %p69 = por %p67, %p68
      %s71 = sadd.s32 %s70, 1
      %p74 = scmp.eq.s32.totalorder %s15, 1
      %p75 = scmp.ne.s32.totalorder %s70, %s72
      %p76 = scmp.eq.s32.totalorder %s15, 0
      %p77 = por %p75, %p76
      %p78 = scmp.ne.s32.totalorder %s70, %s72
      %p79 = scmp.eq.s32.totalorder %s20, 1
      %p80 = por %p78, %p79
      %p81 = scmp.ne.s32.totalorder %s72, %s73
      %p82 = scmp.eq.s32.totalorder %s20, 0
      %p83 = por %p81, %p82
      %p84 = scmp.ne.s32.totalorder %s72, %s73
      %p85 = scmp.eq.s32.totalorder %s21, 1
      %p86 = por %p84, %p85
      %p88 = scmp.ne.s32.totalorder %s73, %s87
      %p89 = scmp.eq.s32.totalorder %s21, 0
      %p90 = por %p88, %p89
      %s92 = sadd.s32 %s91, 1
      %p95 = scmp.eq.s32.totalorder %s15, 1
      %p96 = scmp.ne.s32.totalorder %s91, %s93
      %p97 = scmp.eq.s32.totalorder %s15, 0
      %p98 = por %p96, %p97
      %p99 = scmp.ne.s32.totalorder %s91, %s93
      %p100 = scmp.eq.s32.totalorder %s20, 1
      %p101 = por %p99, %p100
      %p102 = scmp.ne.s32.totalorder %s93, %s94
      %p103 = scmp.eq.s32.totalorder %s20, 0
      %p104 = por %p102, %p103
      %p105 = scmp.ne.s32.totalorder %s93, %s94
      %p106 = scmp.eq.s32.totalorder %s21, 1
      %p107 = por %p105, %p106
      %p109 = scmp.ne.s32.totalorder %s94, %s108
      %p110 = scmp.eq.s32.totalorder %s21, 0
      %p111 = por %p109, %p110
      %s113 = sadd.s32 %s112, 1
      %p116 = scmp.eq.s32.totalorder %s15, 1
      %p117 = scmp.ne.s32.totalorder %s112, %s114
      %p118 = scmp.eq.s32.totalorder %s15, 0
      %p119 = por %p117, %p118
      %p120 = scmp.ne.s32.totalorder %s112, %s114
      %p121 = scmp.eq.s32.totalorder %s20, 1
      %p122 = por %p120, %p121
      %p123 = scmp.ne.s32.totalorder %s114, %s115
      %p124 = scmp.eq.s32.totalorder %s20, 0
      %p125 = por %p123, %p124
      %p126 = scmp.ne.s32.totalorder %s114, %s115
      %p127 = scmp.eq.s32.totalorder %s21, 1
      %p128 = por %p126, %p127
      %p130 = scmp.ne.s32.totalorder %s115, %s129
      %p131 = scmp.eq.s32.totalorder %s21, 0
      %p132 = por %p130, %p131
      %s134 = sadd.s32 %s133, 1
      %p137 = scmp.eq.s32.totalorder %s15, 1
      %p138 = scmp.ne.s32.totalorder %s133, %s135
      %p139 = scmp.eq.s32.totalorder %s15, 0
      %p140 = por %p138, %p139
      %p141 = scmp.ne.s32.totalorder %s133, %s135
      %p142 = scmp.eq.s32.totalorder %s20, 1
      %p143 = por %p141, %p142
      %p144 = scmp.ne.s32.totalorder %s135, %s136
      %p145 = scmp.eq.s32.totalorder %s20, 0
      %p146 = por %p144, %p145
      %p147 = scmp.ne.s32.totalorder %s135, %s136
      %p148 = scmp.eq.s32.totalorder %s21, 1
      %p149 = por %p147, %p148
      %p151 = scmp.ne.s32.totalorder %s136, %s150
      %p152 = scmp.eq.s32.totalorder %s21, 0
      %p153 = por %p151, %p152
      %s155 = sadd.s32 %s154, 1
      %p158 = scmp.eq.s32.totalorder %s15, 1
      %p159 = scmp.ne.s32.totalorder %s154, %s156
      %p160 = scmp.eq.s32.totalorder %s15, 0
      %p161 = por %p159, %p160
      %p162 = scmp.ne.s32.totalorder %s154, %s156
      %p163 = scmp.eq.s32.totalorder %s20, 1
      %p164 = por %p162, %p163
      %p165 = scmp.ne.s32.totalorder %s156, %s157
      %p166 = scmp.eq.s32.totalorder %s20, 0
      %p167 = por %p165, %p166
      %p168 = scmp.ne.s32.totalorder %s156, %s157
      %p169 = scmp.eq.s32.totalorder %s21, 1
      %p170 = por %p168, %p169
      %p172 = scmp.ne.s32.totalorder %s157, %s171
      %p173 = scmp.eq.s32.totalorder %s21, 0
      %p174 = por %p172, %p173
      %s176 = sadd.s32 %s175, 1
      %p179 = scmp.eq.s32.totalorder %s15, 1
      %p180 = scmp.ne.s32.totalorder %s175, %s177
      %p181 = scmp.eq.s32.totalorder %s15, 0
      %p182 = por %p180, %p181
      %p183 = scmp.ne.s32.totalorder %s175, %s177
      %p184 = scmp.eq.s32.totalorder %s20, 1
      %p185 = por %p183, %p184
      %p186 = scmp.ne.s32.totalorder %s177, %s178
      %p187 = scmp.eq.s32.totalorder %s20, 0
      %p188 = por %p186, %p187
      %p189 = scmp.ne.s32.totalorder %s177, %s178
      %p190 = scmp.eq.s32.totalorder %s21, 1
      %p191 = por %p189, %p190
      %p193 = scmp.ne.s32.totalorder %s178, %s192
      %p194 = scmp.eq.s32.totalorder %s21, 0
      %p195 = por %p193, %p194
      %s196 = ssub.s32 %s15, %s22
      %p197 = scmp.eq.s32.totalorder %s196, 0
      %s199 = sadd.s32 %s198, 1
      %s200 = scalar_select %p197, %s198, %s199
      %p203 = pneg %p197
      %p204 = scmp.eq.s32.totalorder %s15, 1
      %p205 = por %p203, %p204
      %p206 = scmp.ne.s32.totalorder %s198, %s201
      %p207 = scmp.eq.s32.totalorder %s15, 0
      %p208 = por %p206, %p207
      %p209 = scmp.ne.s32.totalorder %s198, %s201
      %p210 = scmp.eq.s32.totalorder %s20, 1
      %p211 = por %p209, %p210
      %p212 = scmp.ne.s32.totalorder %s201, %s202
      %p213 = scmp.eq.s32.totalorder %s20, 0
      %p214 = por %p212, %p213
      %p215 = scmp.ne.s32.totalorder %s201, %s202
      %p216 = scmp.eq.s32.totalorder %s21, 1
      %p217 = por %p215, %p216
      %p219 = scmp.ne.s32.totalorder %s202, %s218
      %p220 = scmp.eq.s32.totalorder %s21, 0
      %p221 = por %p219, %p220
      %p222 = scmp.le.s32.totalorder 1, %s15
      %p223 = scmp.lt.s32.totalorder %s15, 3
      %p224 = pnand %p222, %p223
      %p225 = pneg %p224
      // Predicated region
      $region9: #{sparse_stage_forward_pallas.5} parent=5 // pred_check
        _
      $region10: #{sparse_stage_forward_pallas.5} parent=5 // pred_check_branch
        %227 = sbr.rel (%p224) target = $region12
      $region11: #{sparse_stage_forward_pallas.5} parent=5 // pred_region
        %s228 = ssub.s32 %s15, 1
        // Predicated region
        $region13: #{sparse_stage_forward_pallas.5} parent=11 // pred_check
          %p229 = pneg %p62
        $region14: #{sparse_stage_forward_pallas.5} parent=11 // pred_check_branch
          %231 = sbr.rel (%p229) target = $region16
        $region15: #{sparse_stage_forward_pallas.5} parent=11 // pred_region
          _
        $region16: #{sparse_stage_forward_pallas.5} parent=11 // pred_fallthru
          _
        // Predicated region
        $region17: #{sparse_stage_forward_pallas.5} parent=11 // pred_check
          %p232 = pneg %p83
        $region18: #{sparse_stage_forward_pallas.5} parent=11 // pred_check_branch
          %234 = sbr.rel (%p232) target = $region20
        $region19: #{sparse_stage_forward_pallas.5} parent=11 // pred_region
          _
        $region20: #{sparse_stage_forward_pallas.5} parent=11 // pred_fallthru
          _
        // Predicated region
        $region21: #{sparse_stage_forward_pallas.5} parent=11 // pred_check
          %p235 = pneg %p104
        $region22: #{sparse_stage_forward_pallas.5} parent=11 // pred_check_branch
          %237 = sbr.rel (%p235) target = $region24
        $region23: #{sparse_stage_forward_pallas.5} parent=11 // pred_region
          _
        $region24: #{sparse_stage_forward_pallas.5} parent=11 // pred_fallthru
          _
        // Predicated region
        $region25: #{sparse_stage_forward_pallas.5} parent=11 // pred_check
          %p238 = pneg %p125
        $region26: #{sparse_stage_forward_pallas.5} parent=11 // pred_check_branch
          %240 = sbr.rel (%p238) target = $region28
        $region27: #{sparse_stage_forward_pallas.5} parent=11 // pred_region
          _
        $region28: #{sparse_stage_forward_pallas.5} parent=11 // pred_fallthru
          _
        // Predicated region
        $region29: #{sparse_stage_forward_pallas.5} parent=11 // pred_check
          %p241 = pneg %p146
        $region30: #{sparse_stage_forward_pallas.5} parent=11 // pred_check_branch
          %243 = sbr.rel (%p241) target = $region32
        $region31: #{sparse_stage_forward_pallas.5} parent=11 // pred_region
          _
        $region32: #{sparse_stage_forward_pallas.5} parent=11 // pred_fallthru
          _
        // Predicated region
        $region33: #{sparse_stage_forward_pallas.5} parent=11 // pred_check
          %p244 = pneg %p167
        $region34: #{sparse_stage_forward_pallas.5} parent=11 // pred_check_branch
          %246 = sbr.rel (%p244) target = $region36
        $region35: #{sparse_stage_forward_pallas.5} parent=11 // pred_region
          _
        $region36: #{sparse_stage_forward_pallas.5} parent=11 // pred_fallthru
          _
        // Predicated region
        $region37: #{sparse_stage_forward_pallas.5} parent=11 // pred_check
          %p247 = pneg %p188
        $region38: #{sparse_stage_forward_pallas.5} parent=11 // pred_check_branch
          %249 = sbr.rel (%p247) target = $region40
        $region39: #{sparse_stage_forward_pallas.5} parent=11 // pred_region
          %251 = vsyncadd [#allocation3], 0
          %s252 = sshll.u32 %s7, 4
          %s253 = int_to_ptr.hbm [resolvable:$true] %s252
          %s254 = sshll.u32 [#allocation2], 4
          %s255 = int_to_ptr.vmem [resolvable:$true] %s254
          %260 = dma.hbm_to_vmem [thread:$0]  %s253, 9216, %s255, [#allocation3], 128, 128, 8
        $region40: #{sparse_stage_forward_pallas.5} parent=11 // pred_fallthru
          _
      $region12: #{sparse_stage_forward_pallas.5} parent=5 // pred_fallthru
        _
      %p261 = scmp.lt.s32.totalorder %s15, 2
      // Predicated region
      $region41: #{sparse_stage_forward_pallas.5} parent=5 // pred_check
        %p262 = pneg %p261
      $region42: #{sparse_stage_forward_pallas.5} parent=5 // pred_check_branch
        %264 = sbr.rel (%p262) target = $region44
      $region43: #{sparse_stage_forward_pallas.5} parent=5 // pred_region
        // Predicated region
        $region45: #{sparse_stage_forward_pallas.5} parent=43 // pred_check
          %p265 = pneg %p35
        $region46: #{sparse_stage_forward_pallas.5} parent=43 // pred_check_branch
          %267 = sbr.rel (%p265) target = $region48
        $region47: #{sparse_stage_forward_pallas.5} parent=43 // pred_region
          %p268 = scmp.lt.s32.totalorder %s15, 1
          %s269 = scalar_select %p268, %s15, 1
          %s270 = smul.addr %s269, 4
          %s271 = scalar_lea.vmem %s0, %s270
        $region48: #{sparse_stage_forward_pallas.5} parent=43 // pred_fallthru
          _
      $region44: #{sparse_stage_forward_pallas.5} parent=5 // pred_fallthru
        _
      %p272 = scmp.le.s32.totalorder 1, %s15
      %p273 = scmp.lt.s32.totalorder %s15, 3
      %p274 = pnand %p272, %p273
      %p275 = pneg %p274
      // Predicated region
      $region49: #{sparse_stage_forward_pallas.5} parent=5 // pred_check
        _
      $region50: #{sparse_stage_forward_pallas.5} parent=5 // pred_check_branch
        %277 = sbr.rel (%p274) target = $region52
      $region51: #{sparse_stage_forward_pallas.5} parent=5 // pred_region
        %s278 = ssub.s32 %s15, 1
        // Predicated region
        $region53: #{sparse_stage_forward_pallas.5} parent=51 // pred_check
          %p279 = pneg %p188
        $region54: #{sparse_stage_forward_pallas.5} parent=51 // pred_check_branch
          %281 = sbr.rel (%p279) target = $region56
        $region55: #{sparse_stage_forward_pallas.5} parent=51 // pred_region
          %283 = dma.done [#allocation3], 9216
        $region56: #{sparse_stage_forward_pallas.5} parent=51 // pred_fallthru
          _
        %p284 = scmp.lt.s32.totalorder %s20, 1
        %s285 = scalar_select %p284, %s20, 1
        %s286 = smul.addr %s285, 4
        %s287 = scalar_lea.vmem %s0, %s286
        %p288 = pneg %p41
        %p289 = pneg %p38
        %p290 = pneg %p62
        %p291 = pneg %p59
        %p292 = pneg %p83
        %p293 = pneg %p80
        %p294 = pneg %p104
        %p295 = pneg %p101
        %p296 = pneg %p125
        %p297 = pneg %p122
        %p298 = pneg %p146
        %p299 = pneg %p143
        %p300 = pneg %p167
        %p301 = pneg %p164
        %p302 = pneg %p188
        %p303 = pneg %p185
        %p304 = pneg %p214
        %p305 = pneg %p211
        %p306 = scmp.lt.s32.totalorder %s20, 1
        %s307 = scalar_select %p306, %s20, 1
        %s308 = smul.addr %s307, 4
        %s309 = scalar_lea.vmem %s8, %s308
        %p310 = scmp.lt.s32.totalorder %s20, 1
        %s311 = scalar_select %p310, %s20, 1
        %s312 = smul.addr %s311, 4
        %s313 = scalar_lea.vmem %s0, %s312
        %p314 = scmp.lt.s32.totalorder %s20, 1
        %s315 = scalar_select %p314, %s20, 1
        %s316 = smul.addr %s315, 4
        %s317 = scalar_lea.vmem %s8, %s316
        %v318 = vld [vmem:[%s313] sm:$0xf]
        %v319 = vld [vmem:[%s1] sm:$0xf]
        %321 = vset.pattern.permute.xlu0 0
        %322 = vperm.xlu0 %321, %v319
        %v323 = vpop.permute.xlu0 %322
        %v325 = vmul.f32 %v318, %v323
        %v326 = vld [vmem:[%s2] sm:$0xf]
        %328 = vset.pattern.permute.xlu0 0
        %329 = vperm.xlu0 %328, %v326
        %v330 = vpop.permute.xlu0 %329
        %v332 = vadd.f32 %v325, %v330
        %v333 = vmax.f32 %v332, 0.0
        %v334 = vld [vmem:[%s3] sm:$0xff]
        %v335 = vld [vmem:[%s3 + $0x8] sm:$0xff]
        %vm336 = vcmask 31744
        %v338 = vsel %vm336, %v334, 0
        %v341 = vsel %vm336, %v335, 0
        %vm343 = vcmask 1043456
        %v345 = vsel %vm343, %v333, 0
        %347 = vmatpush.msra.mxu0 0.0
        %348 = vmatpush.msra.mxu0 0.0
        %349 = vmatpush.msra.mxu0 0.0
        %350 = vmatpush.msra.mxu0 0.0
        %351 = vmatpush.msra.mxu0 0.0
        %352 = vmatpush.msra.mxu0 0.0
        %353 = vmatpush.msra.mxu0 0.0
        %354 = vmatpush.msra.mxu0 0.0
        %355 = vmatpush.msra.mxu0 0.0
        %356 = vmatpush.msra.mxu0 0.0
        %357 = vmatpush.msra.mxu0 0.0
        %358 = vmatpush.msra.mxu0 0.0
        %359 = vmatpush.msra.mxu0 0.0
        %360 = vmatpush.msra.mxu0 0.0
        %361 = vmatpush.msra.mxu0 0.0
        %362 = vmatpush.msra.mxu0 %v345
        %363 = vmatmul.f32.gmra.mxu0 %v338
        %v364 = vpop.f32.mrf.mxu0
        %v365 = vadd.f32 0.0, %v364
        %366 = vmatmul.f32.gmra.mxu0 %v341
        %v367 = vpop.f32.mrf.mxu0
        %v368 = vadd.f32 0.0, %v367
        %369 = vdwg.mxu0
        %v370 = vld [vmem:[%s4] sm:$0xff]
        %v371 = vld [vmem:[%s4 + $0x8] sm:$0xff]
        %373 = vset.pattern.permute.xlu0 0
        %374 = vperm.xlu0 %373, %v370
        %v375 = vpop.permute.xlu0 %374
        %378 = vset.pattern.permute.xlu0 0
        %379 = vperm.xlu0 %378, %v371
        %v380 = vpop.permute.xlu0 %379
        %v382 = vmul.f32 %v365, %v375
        %v383 = vmul.f32 %v368, %v380
        %v384 = vld [vmem:[%s5] sm:$0xff]
        %v385 = vld [vmem:[%s5 + $0x8] sm:$0xff]
        %387 = vset.pattern.permute.xlu0 0
        %388 = vperm.xlu0 %387, %v384
        %v389 = vpop.permute.xlu0 %388
        %392 = vset.pattern.permute.xlu0 0
        %393 = vperm.xlu0 %392, %v385
        %v394 = vpop.permute.xlu0 %393
        %v396 = vadd.f32 %v382, %v389
        %v397 = vadd.f32 %v383, %v394
        %v398 = vmax.f32 %v396, 0.0
        %v399 = vmax.f32 %v397, 0.0
        %v400 = vld [vmem:[#allocation2] sm:$0xff]
        %v401 = vld [vmem:[#allocation2 + $0x8] sm:$0xff]
        %v402 = vld [vmem:[#allocation2 + $0x10] sm:$0xff]
        %v403 = vld [vmem:[#allocation2 + $0x18] sm:$0xff]
        %v404 = vld [vmem:[#allocation2 + $0x20] sm:$0xff]
        %v405 = vld [vmem:[#allocation2 + $0x28] sm:$0xff]
        %v406 = vld [vmem:[#allocation2 + $0x30] sm:$0xff]
        %v407 = vld [vmem:[#allocation2 + $0x38] sm:$0xff]
        %vm408 = vcmask 523264
        %v410 = vsel %vm408, %v398, 0
        %v413 = vsel %vm408, %v399, 0
        %415 = vmatpush.msra.mxu0 0.0
        %416 = vmatpush.msra.mxu0 0.0
        %417 = vmatpush.msra.mxu0 0.0
        %418 = vmatpush.msra.mxu0 0.0
        %419 = vmatpush.msra.mxu0 0.0
        %420 = vmatpush.msra.mxu0 0.0
        %421 = vmatpush.msra.mxu0 0.0
        %422 = vmatpush.msra.mxu0 0.0
        %423 = vmatpush.msra.mxu0 %v407
        %424 = vmatpush.msra.mxu0 %v406
        %425 = vmatpush.msra.mxu0 %v405
        %426 = vmatpush.msra.mxu0 %v404
        %427 = vmatpush.msra.mxu0 %v403
        %428 = vmatpush.msra.mxu0 %v402
        %429 = vmatpush.msra.mxu0 %v401
        %430 = vmatpush.msra.mxu0 %v400
        %431 = vmatmul.f32.gmra.mxu0 %v410
        %v432 = vpop.f32.mrf.mxu0
        %v433 = vadd.f32 0.0, %v432
        %434 = vmatmul.f32.gmra.mxu0 %v413
        %v435 = vpop.f32.mrf.mxu0
        %v436 = vadd.f32 0.0, %v435
        %437 = vdwg.mxu0
        %s438 = scalar_lea.vmem [#allocation2], 64
        %v439 = vld [vmem:[%s438] sm:$0xff]
        %v440 = vld [vmem:[%s438 + $0x8] sm:$0xff]
        %v441 = vld [vmem:[%s438 + $0x10] sm:$0xff]
        %v442 = vld [vmem:[%s438 + $0x18] sm:$0xff]
        %v443 = vld [vmem:[%s438 + $0x20] sm:$0xff]
        %v444 = vld [vmem:[%s438 + $0x28] sm:$0xff]
        %v445 = vld [vmem:[%s438 + $0x30] sm:$0xff]
        %v446 = vld [vmem:[%s438 + $0x38] sm:$0xff]
        %447 = vmatpush.msra.mxu0 0.0
        %448 = vmatpush.msra.mxu0 0.0
        %449 = vmatpush.msra.mxu0 0.0
        %450 = vmatpush.msra.mxu0 0.0
        %451 = vmatpush.msra.mxu0 0.0
        %452 = vmatpush.msra.mxu0 0.0
        %453 = vmatpush.msra.mxu0 0.0
        %454 = vmatpush.msra.mxu0 0.0
        %455 = vmatpush.msra.mxu0 %v446
        %456 = vmatpush.msra.mxu0 %v445
        %457 = vmatpush.msra.mxu0 %v444
        %458 = vmatpush.msra.mxu0 %v443
        %459 = vmatpush.msra.mxu0 %v442
        %460 = vmatpush.msra.mxu0 %v441
        %461 = vmatpush.msra.mxu0 %v440
        %462 = vmatpush.msra.mxu0 %v439
        %463 = vmatmul.f32.gmra.mxu0 %v410
        %v464 = vpop.f32.mrf.mxu0
        %v465 = vadd.f32 0.0, %v464
        %466 = vmatmul.f32.gmra.mxu0 %v413
        %v467 = vpop.f32.mrf.mxu0
        %v468 = vadd.f32 0.0, %v467
        %469 = vdwg.mxu0
        %s470 = scalar_lea.vmem [#allocation2], 128
        %v471 = vld [vmem:[%s470] sm:$0xff]
        %v472 = vld [vmem:[%s470 + $0x8] sm:$0xff]
        %v473 = vld [vmem:[%s470 + $0x10] sm:$0xff]
        %v474 = vld [vmem:[%s470 + $0x18] sm:$0xff]
        %v475 = vld [vmem:[%s470 + $0x20] sm:$0xff]
        %v476 = vld [vmem:[%s470 + $0x28] sm:$0xff]
        %v477 = vld [vmem:[%s470 + $0x30] sm:$0xff]
        %v478 = vld [vmem:[%s470 + $0x38] sm:$0xff]
        %479 = vmatpush.msra.mxu0 0.0
        %480 = vmatpush.msra.mxu0 0.0
        %481 = vmatpush.msra.mxu0 0.0
        %482 = vmatpush.msra.mxu0 0.0
        %483 = vmatpush.msra.mxu0 0.0
        %484 = vmatpush.msra.mxu0 0.0
        %485 = vmatpush.msra.mxu0 0.0
        %486 = vmatpush.msra.mxu0 0.0
        %487 = vmatpush.msra.mxu0 %v478
        %488 = vmatpush.msra.mxu0 %v477
        %489 = vmatpush.msra.mxu0 %v476
        %490 = vmatpush.msra.mxu0 %v475
        %491 = vmatpush.msra.mxu0 %v474
        %492 = vmatpush.msra.mxu0 %v473
        %493 = vmatpush.msra.mxu0 %v472
        %494 = vmatpush.msra.mxu0 %v471
        %495 = vmatmul.f32.gmra.mxu0 %v410
        %v496 = vpop.f32.mrf.mxu0
        %v497 = vadd.f32 0.0, %v496
        %498 = vmatmul.f32.gmra.mxu0 %v413
        %v499 = vpop.f32.mrf.mxu0
        %v500 = vadd.f32 0.0, %v499
        %501 = vdwg.mxu0
        %s502 = scalar_lea.vmem [#allocation2], 192
        %v503 = vld [vmem:[%s502] sm:$0xff]
        %v504 = vld [vmem:[%s502 + $0x8] sm:$0xff]
        %v505 = vld [vmem:[%s502 + $0x10] sm:$0xff]
        %v506 = vld [vmem:[%s502 + $0x18] sm:$0xff]
        %v507 = vld [vmem:[%s502 + $0x20] sm:$0xff]
        %v508 = vld [vmem:[%s502 + $0x28] sm:$0xff]
        %v509 = vld [vmem:[%s502 + $0x30] sm:$0xff]
        %v510 = vld [vmem:[%s502 + $0x38] sm:$0xff]
        %511 = vmatpush.msra.mxu0 0.0
        %512 = vmatpush.msra.mxu0 0.0
        %513 = vmatpush.msra.mxu0 0.0
        %514 = vmatpush.msra.mxu0 0.0
        %515 = vmatpush.msra.mxu0 0.0
        %516 = vmatpush.msra.mxu0 0.0
        %517 = vmatpush.msra.mxu0 0.0
        %518 = vmatpush.msra.mxu0 0.0
        %519 = vmatpush.msra.mxu0 %v510
        %520 = vmatpush.msra.mxu0 %v509
        %521 = vmatpush.msra.mxu0 %v508
        %522 = vmatpush.msra.mxu0 %v507
        %523 = vmatpush.msra.mxu0 %v506
        %524 = vmatpush.msra.mxu0 %v505
        %525 = vmatpush.msra.mxu0 %v504
        %526 = vmatpush.msra.mxu0 %v503
        %527 = vmatmul.f32.gmra.mxu0 %v410
        %v528 = vpop.f32.mrf.mxu0
        %v529 = vadd.f32 0.0, %v528
        %530 = vmatmul.f32.gmra.mxu0 %v413
        %v531 = vpop.f32.mrf.mxu0
        %v532 = vadd.f32 0.0, %v531
        %533 = vdwg.mxu0
        %s534 = scalar_lea.vmem [#allocation2], 256
        %v535 = vld [vmem:[%s534] sm:$0xff]
        %v536 = vld [vmem:[%s534 + $0x8] sm:$0xff]
        %v537 = vld [vmem:[%s534 + $0x10] sm:$0xff]
        %v538 = vld [vmem:[%s534 + $0x18] sm:$0xff]
        %v539 = vld [vmem:[%s534 + $0x20] sm:$0xff]
        %v540 = vld [vmem:[%s534 + $0x28] sm:$0xff]
        %v541 = vld [vmem:[%s534 + $0x30] sm:$0xff]
        %v542 = vld [vmem:[%s534 + $0x38] sm:$0xff]
        %543 = vmatpush.msra.mxu0 0.0
        %544 = vmatpush.msra.mxu0 0.0
        %545 = vmatpush.msra.mxu0 0.0
        %546 = vmatpush.msra.mxu0 0.0
        %547 = vmatpush.msra.mxu0 0.0
        %548 = vmatpush.msra.mxu0 0.0
        %549 = vmatpush.msra.mxu0 0.0
        %550 = vmatpush.msra.mxu0 0.0
        %551 = vmatpush.msra.mxu0 %v542
        %552 = vmatpush.msra.mxu0 %v541
        %553 = vmatpush.msra.mxu0 %v540
        %554 = vmatpush.msra.mxu0 %v539
        %555 = vmatpush.msra.mxu0 %v538
        %556 = vmatpush.msra.mxu0 %v537
        %557 = vmatpush.msra.mxu0 %v536
        %558 = vmatpush.msra.mxu0 %v535
        %559 = vmatmul.f32.gmra.mxu0 %v410
        %v560 = vpop.f32.mrf.mxu0
        %v561 = vadd.f32 0.0, %v560
        %562 = vmatmul.f32.gmra.mxu0 %v413
        %v563 = vpop.f32.mrf.mxu0
        %v564 = vadd.f32 0.0, %v563
        %565 = vdwg.mxu0
        %s566 = scalar_lea.vmem [#allocation2], 320
        %v567 = vld [vmem:[%s566] sm:$0xff]
        %v568 = vld [vmem:[%s566 + $0x8] sm:$0xff]
        %v569 = vld [vmem:[%s566 + $0x10] sm:$0xff]
        %v570 = vld [vmem:[%s566 + $0x18] sm:$0xff]
        %v571 = vld [vmem:[%s566 + $0x20] sm:$0xff]
        %v572 = vld [vmem:[%s566 + $0x28] sm:$0xff]
        %v573 = vld [vmem:[%s566 + $0x30] sm:$0xff]
        %v574 = vld [vmem:[%s566 + $0x38] sm:$0xff]
        %575 = vmatpush.msra.mxu0 0.0
        %576 = vmatpush.msra.mxu0 0.0
        %577 = vmatpush.msra.mxu0 0.0
        %578 = vmatpush.msra.mxu0 0.0
        %579 = vmatpush.msra.mxu0 0.0
        %580 = vmatpush.msra.mxu0 0.0
        %581 = vmatpush.msra.mxu0 0.0
        %582 = vmatpush.msra.mxu0 0.0
        %583 = vmatpush.msra.mxu0 %v574
        %584 = vmatpush.msra.mxu0 %v573
        %585 = vmatpush.msra.mxu0 %v572
        %586 = vmatpush.msra.mxu0 %v571
        %587 = vmatpush.msra.mxu0 %v570
        %588 = vmatpush.msra.mxu0 %v569
        %589 = vmatpush.msra.mxu0 %v568
        %590 = vmatpush.msra.mxu0 %v567
        %591 = vmatmul.f32.gmra.mxu0 %v410
        %v592 = vpop.f32.mrf.mxu0
        %v593 = vadd.f32 0.0, %v592
        %594 = vmatmul.f32.gmra.mxu0 %v413
        %v595 = vpop.f32.mrf.mxu0
        %v596 = vadd.f32 0.0, %v595
        %597 = vdwg.mxu0
        %s598 = scalar_lea.vmem [#allocation2], 384
        %v599 = vld [vmem:[%s598] sm:$0xff]
        %v600 = vld [vmem:[%s598 + $0x8] sm:$0xff]
        %v601 = vld [vmem:[%s598 + $0x10] sm:$0xff]
        %v602 = vld [vmem:[%s598 + $0x18] sm:$0xff]
        %v603 = vld [vmem:[%s598 + $0x20] sm:$0xff]
        %v604 = vld [vmem:[%s598 + $0x28] sm:$0xff]
        %v605 = vld [vmem:[%s598 + $0x30] sm:$0xff]
        %v606 = vld [vmem:[%s598 + $0x38] sm:$0xff]
        %607 = vmatpush.msra.mxu0 0.0
        %608 = vmatpush.msra.mxu0 0.0
        %609 = vmatpush.msra.mxu0 0.0
        %610 = vmatpush.msra.mxu0 0.0
        %611 = vmatpush.msra.mxu0 0.0
        %612 = vmatpush.msra.mxu0 0.0
        %613 = vmatpush.msra.mxu0 0.0
        %614 = vmatpush.msra.mxu0 0.0
        %615 = vmatpush.msra.mxu0 %v606
        %616 = vmatpush.msra.mxu0 %v605
        %617 = vmatpush.msra.mxu0 %v604
        %618 = vmatpush.msra.mxu0 %v603
        %619 = vmatpush.msra.mxu0 %v602
        %620 = vmatpush.msra.mxu0 %v601
        %621 = vmatpush.msra.mxu0 %v600
        %622 = vmatpush.msra.mxu0 %v599
        %623 = vmatmul.f32.gmra.mxu0 %v410
        %v624 = vpop.f32.mrf.mxu0
        %v625 = vadd.f32 0.0, %v624
        %626 = vmatmul.f32.gmra.mxu0 %v413
        %v627 = vpop.f32.mrf.mxu0
        %v628 = vadd.f32 0.0, %v627
        %629 = vdwg.mxu0
        %s630 = scalar_lea.vmem [#allocation2], 448
        %v631 = vld [vmem:[%s630] sm:$0xff]
        %v632 = vld [vmem:[%s630 + $0x8] sm:$0xff]
        %v633 = vld [vmem:[%s630 + $0x10] sm:$0xff]
        %v634 = vld [vmem:[%s630 + $0x18] sm:$0xff]
        %v635 = vld [vmem:[%s630 + $0x20] sm:$0xff]
        %v636 = vld [vmem:[%s630 + $0x28] sm:$0xff]
        %v637 = vld [vmem:[%s630 + $0x30] sm:$0xff]
        %v638 = vld [vmem:[%s630 + $0x38] sm:$0xff]
        %639 = vmatpush.msra.mxu0 0.0
        %640 = vmatpush.msra.mxu0 0.0
        %641 = vmatpush.msra.mxu0 0.0
        %642 = vmatpush.msra.mxu0 0.0
        %643 = vmatpush.msra.mxu0 0.0
        %644 = vmatpush.msra.mxu0 0.0
        %645 = vmatpush.msra.mxu0 0.0
        %646 = vmatpush.msra.mxu0 0.0
        %647 = vmatpush.msra.mxu0 %v638
        %648 = vmatpush.msra.mxu0 %v637
        %649 = vmatpush.msra.mxu0 %v636
        %650 = vmatpush.msra.mxu0 %v635
        %651 = vmatpush.msra.mxu0 %v634
        %652 = vmatpush.msra.mxu0 %v633
        %653 = vmatpush.msra.mxu0 %v632
        %654 = vmatpush.msra.mxu0 %v631
        %655 = vmatmul.f32.gmra.mxu0 %v410
        %v656 = vpop.f32.mrf.mxu0
        %v657 = vadd.f32 0.0, %v656
        %658 = vmatmul.f32.gmra.mxu0 %v413
        %v659 = vpop.f32.mrf.mxu0
        %v660 = vadd.f32 0.0, %v659
        %661 = vdwg.mxu0
        %s662 = scalar_lea.vmem [#allocation2], 512
        %v663 = vld [vmem:[%s662] sm:$0xff]
        %v664 = vld [vmem:[%s662 + $0x8] sm:$0xff]
        %v665 = vld [vmem:[%s662 + $0x10] sm:$0xff]
        %v666 = vld [vmem:[%s662 + $0x18] sm:$0xff]
        %v667 = vld [vmem:[%s662 + $0x20] sm:$0xff]
        %v668 = vld [vmem:[%s662 + $0x28] sm:$0xff]
        %v669 = vld [vmem:[%s662 + $0x30] sm:$0xff]
        %v670 = vld [vmem:[%s662 + $0x38] sm:$0xff]
        %671 = vmatpush.msra.mxu0 0.0
        %672 = vmatpush.msra.mxu0 0.0
        %673 = vmatpush.msra.mxu0 0.0
        %674 = vmatpush.msra.mxu0 0.0
        %675 = vmatpush.msra.mxu0 0.0
        %676 = vmatpush.msra.mxu0 0.0
        %677 = vmatpush.msra.mxu0 0.0
        %678 = vmatpush.msra.mxu0 0.0
        %679 = vmatpush.msra.mxu0 %v670
        %680 = vmatpush.msra.mxu0 %v669
        %681 = vmatpush.msra.mxu0 %v668
        %682 = vmatpush.msra.mxu0 %v667
        %683 = vmatpush.msra.mxu0 %v666
        %684 = vmatpush.msra.mxu0 %v665
        %685 = vmatpush.msra.mxu0 %v664
        %686 = vmatpush.msra.mxu0 %v663
        %687 = vmatmul.f32.gmra.mxu0 %v410
        %v688 = vpop.f32.mrf.mxu0
        %v689 = vadd.f32 0.0, %v688
        %690 = vmatmul.f32.gmra.mxu0 %v413
        %v691 = vpop.f32.mrf.mxu0
        %v692 = vadd.f32 0.0, %v691
        %693 = vdwg.mxu0
        %v694 = vld [vmem:[%s6] sm:$0xff]
        %696 = vst [vmem:[#allocation1] ss:$2 sm:$0xff] %v694
        %v697 = vld.sshfl [vmem:[#allocation1] sm:$0xff pattern:$0x75316420]
        %v698 = vld.sshfl [vmem:[#allocation1 + $0x8] sm:$0xff pattern:$0x75316420]
        %vm700 = vcmask 130048
        %v701 = vsel %vm700, %v698, 0
        %703 = vmatpush.msra.mxu0 %v660
        %704 = vmatpush.msra.mxu0 %v657
        %705 = vmatpush.msra.mxu0 %v628
        %706 = vmatpush.msra.mxu0 %v625
        %707 = vmatpush.msra.mxu0 %v596
        %708 = vmatpush.msra.mxu0 %v593
        %709 = vmatpush.msra.mxu0 %v564
        %710 = vmatpush.msra.mxu0 %v561
        %711 = vmatpush.msra.mxu0 %v532
        %712 = vmatpush.msra.mxu0 %v529
        %713 = vmatpush.msra.mxu0 %v500
        %714 = vmatpush.msra.mxu0 %v497
        %715 = vmatpush.msra.mxu0 %v468
        %716 = vmatpush.msra.mxu0 %v465
        %717 = vmatpush.msra.mxu0 %v436
        %718 = vmatpush.msra.mxu0 %v433
        %719 = vmatmul.f32.gmra.mxu0 %v697
        %v720 = vpop.f32.mrf.mxu0
        %v721 = vadd.f32 0.0, %v720
        %722 = vdwg.mxu0
        %723 = vmatpush.msra.mxu0 0.0
        %724 = vmatpush.msra.mxu0 0.0
        %725 = vmatpush.msra.mxu0 0.0
        %726 = vmatpush.msra.mxu0 0.0
        %727 = vmatpush.msra.mxu0 0.0
        %728 = vmatpush.msra.mxu0 0.0
        %729 = vmatpush.msra.mxu0 0.0
        %730 = vmatpush.msra.mxu0 0.0
        %731 = vmatpush.msra.mxu0 0.0
        %732 = vmatpush.msra.mxu0 0.0
        %733 = vmatpush.msra.mxu0 0.0
        %734 = vmatpush.msra.mxu0 0.0
        %735 = vmatpush.msra.mxu0 0.0
        %736 = vmatpush.msra.mxu0 0.0
        %737 = vmatpush.msra.mxu0 %v692
        %738 = vmatpush.msra.mxu0 %v689
        %739 = vmatmul.f32.gmra.mxu0 %v701
        %v740 = vpop.f32.mrf.mxu0
        %v741 = vadd.f32 %v721, %v740
        %742 = vdwg.mxu0
        %vm743 = vcmask 519168
        %744 = vst.msk [vmem:[%s317] sm:$0xf] %vm743, %v741
        %p745 = scmp.lt.s32.totalorder %s20, 1
        %s746 = scalar_select %p745, %s20, 1
        %s747 = smul.addr %s746, 4
        %s748 = scalar_lea.vmem %s8, %s747
        // Predicated region
        $region57: #{sparse_stage_forward_pallas.5} parent=51 // pred_check
          %p749 = pneg %p211
        $region58: #{sparse_stage_forward_pallas.5} parent=51 // pred_check_branch
          %751 = sbr.rel (%p749) target = $region60
        $region59: #{sparse_stage_forward_pallas.5} parent=51 // pred_region
          _
        $region60: #{sparse_stage_forward_pallas.5} parent=51 // pred_fallthru
          _
      $region52: #{sparse_stage_forward_pallas.5} parent=5 // pred_fallthru
        _
      %p752 = scmp.le.s32.totalorder 2, %s15
      // Predicated region
      $region61: #{sparse_stage_forward_pallas.5} parent=5 // pred_check
        %p753 = pneg %p752
      $region62: #{sparse_stage_forward_pallas.5} parent=5 // pred_check_branch
        %755 = sbr.rel (%p753) target = $region64
      $region63: #{sparse_stage_forward_pallas.5} parent=5 // pred_region
        %s756 = ssub.s32 %s15, 2
        // Predicated region
        $region65: #{sparse_stage_forward_pallas.5} parent=63 // pred_check
          %p757 = pneg %p217
        $region66: #{sparse_stage_forward_pallas.5} parent=63 // pred_check_branch
          %759 = sbr.rel (%p757) target = $region68
        $region67: #{sparse_stage_forward_pallas.5} parent=63 // pred_region
          %p760 = scmp.lt.s32.totalorder %s21, 1
          %s761 = scalar_select %p760, %s21, 1
          %s762 = smul.addr %s761, 4
          %s763 = scalar_lea.vmem %s8, %s762
        $region68: #{sparse_stage_forward_pallas.5} parent=63 // pred_fallthru
          _
      $region64: #{sparse_stage_forward_pallas.5} parent=5 // pred_fallthru
        _
    $region6: #{sparse_stage_forward_pallas.5} parent=1 // loop_footer
      %s19 = sadd.s32 1, %s15
    $region7: #{sparse_stage_forward_pallas.5} parent=1 // loop_footer_branch
      %14 = sbr.rel target = $region3
    $region8: #{sparse_stage_forward_pallas.5} parent=1 // loop_exit
      _
    %764 = vsyncpa [#allocation3], 1
    %s765 = scalar_lea.sflag [#allocation3], 1
    %766 = vsyncpa %s765, 1

</llo_original>
